<compile_context>
chip_gen: v7x
topology: tpu7x:2x2x1
jax: 0.10.0
libtpu: 0.0.40
codegen_flags: <defaults>
</compile_context>

<pallas_src>
import jax
import jax.numpy as jnp
from jax import lax
from jax.experimental import pallas as pl
from jax.experimental.pallas import tpu as pltpu


# Whole-array, VMEM-resident operand (no grid, no pipelining, no double-buffer).
_VMEM = pl.BlockSpec(memory_space=pltpu.MemorySpace.VMEM)


# ----------------------------------------------------------------------------
# Kernel 1: bidirectional encoder LSTM - the whole sequence in ONE kernel.
# Forward and backward directions are interleaved inside the same fori_loop
# body.  Input projections (x @ W_ih + b) are precomputed in the wrapper, so
# each step only does the recurrent (B, h2) @ (h2, 4*h2) dot + gate math.
# ----------------------------------------------------------------------------
def encoder_kernel(xwf_ref, xwb_ref, whhf_ref, whhb_ref,
                   encf_ref, encb_ref, h0_ref, c0_ref):
    S, B, _ = xwf_ref.shape
    h2 = whhf_ref.shape[0]

    whh_f = whhf_ref[...]
    whh_b = whhb_ref[...]

    def cell(gates, c):
        # PyTorch gate order: i, f, g, o
        i_g = jax.nn.sigmoid(gates[:, 0 * h2:1 * h2])
        f_g = jax.nn.sigmoid(gates[:, 1 * h2:2 * h2])
        g_g = jnp.tanh(gates[:, 2 * h2:3 * h2])
        o_g = jax.nn.sigmoid(gates[:, 3 * h2:4 * h2])
        c_new = f_g * c + i_g * g_g
        h_new = o_g * jnp.tanh(c_new)
        return h_new, c_new

    def body(t, carry):
        hf, cf, hb, cb = carry
        tb = S - 1 - t
        gf = xwf_ref[t] + jnp.dot(hf, whh_f, preferred_element_type=jnp.float32)
        gb = xwb_ref[tb] + jnp.dot(hb, whh_b, preferred_element_type=jnp.float32)
        hf, cf = cell(gf, cf)
        hb, cb = cell(gb, cb)
        encf_ref[t] = hf            # time-major store, leading-axis dynamic idx
        encb_ref[tb] = hb
        return hf, cf, hb, cb

    z = jnp.zeros((B, h2), jnp.float32)
    hf, cf, hb, cb = lax.fori_loop(0, S, body, (z, z, z, z))

    # Final states, concatenated [fwd, bwd] along features -> decoder init.
    h0_ref[:, :h2] = hf
    h0_ref[:, h2:] = hb
    c0_ref[:, :h2] = cf
    c0_ref[:, h2:] = cb


def run_encoder(xw_f, xw_b, whh_f, whh_b):
    S, B, _ = xw_f.shape
    h2 = whh_f.shape[0]
    out_shape = (
        jax.ShapeDtypeStruct((S, B, h2), jnp.float32),   # enc fwd half (time-major)
        jax.ShapeDtypeStruct((S, B, h2), jnp.float32),   # enc bwd half (time-major)
        jax.ShapeDtypeStruct((B, 2 * h2), jnp.float32),  # decoder initial h
        jax.ShapeDtypeStruct((B, 2 * h2), jnp.float32),  # decoder initial c
    )
    return pl.pallas_call(
        encoder_kernel,
        out_shape=out_shape,
        in_specs=[_VMEM] * 4,
        out_specs=(_VMEM,) * 4,
    )(xw_f, xw_b, whh_f, whh_b)


# ----------------------------------------------------------------------------
# Kernel 2: fused decoder - the entire teacher-forcing loop in ONE kernel.
# Per step: fused-gate LSTM cell (single (B,2H)@(2H,4H) recurrent dot),
# MXU batched-dot attention over the resident encoder output, linout + tanh.
# The generator is hoisted out (applied to all T steps after the kernel).
# ----------------------------------------------------------------------------
def decoder_kernel(xw_ref, wrec_ref, enc_ref, nmask_ref, wout_ref, bout_ref,
                   h0_ref, c0_ref, op_ref):
    T = xw_ref.shape[0]
    B, H = h0_ref.shape

    wrec = wrec_ref[...]               # (2H, 4H): stacked [W_ih_op ; W_hh]
    enc = enc_ref[...]                 # (B, S, H) batch-major encoder output
    nmask = nmask_ref[...]             # (B, 1, S) additive mask (0 / -1e9)
    w_ctx = wout_ref[:H, :]            # linout weight rows for the context
    w_dec = wout_ref[H:, :]            # linout weight rows for decout
    bout = bout_ref[...]               # (1, H)

    def body(t, carry):
        h, c, op = carry
        # ---- LSTM cell: decin = cat([emb, op]); emb part precomputed in xw --
        state = jnp.concatenate([op, h], axis=1)                     # (B, 2H)
        gates = xw_ref[t] + jnp.dot(state, wrec,
                                    preferred_element_type=jnp.float32)
        i_g = jax.nn.sigmoid(gates[:, 0 * H:1 * H])
        f_g = jax.nn.sigmoid(gates[:, 1 * H:2 * H])
        g_g = jnp.tanh(gates[:, 2 * H:3 * H])
        o_g = jax.nn.sigmoid(gates[:, 3 * H:4 * H])
        c_new = f_g * c + i_g * g_g
        h_new = o_g * jnp.tanh(c_new)                                # decout (B, H)

        # ---- attention: MXU batched dots, lane-dense (B, S) score layout ----
        q = h_new[:, None, :]                                        # (B, 1, H)
        scores = jnp.einsum('bqd,bsd->bqs', q, enc,
                            preferred_element_type=jnp.float32) + nmask
        m = jnp.max(scores, axis=2, keepdims=True)
        e = jnp.exp(scores - m)
        denom = jnp.sum(e, axis=2, keepdims=True)
        w = e * pl.reciprocal(denom, approx=True)                    # softmax(S)
        ctx = jnp.einsum('bqs,bsd->bqd', w, enc,
                         preferred_element_type=jnp.float32)[:, 0, :]  # (B, H)

        # linout(cat([context, decout])) as split-weight dots (no concat)
        op_new = jnp.tanh(
            jnp.dot(ctx, w_ctx, preferred_element_type=jnp.float32)
            + jnp.dot(h_new, w_dec, preferred_element_type=jnp.float32)
            + bout)

        op_ref[t] = op_new
        return h_new, c_new, op_new

    h = h0_ref[...]
    c = c0_ref[...]
    op0 = jnp.zeros_like(h)
    lax.fori_loop(0, T, body, (h, c, op0))


def run_decoder(xw_dec, w_rec, enc, nmask, w_out, b_out, h0, c0):
    T, B, _ = xw_dec.shape
    H = h0.shape[1]
    return pl.pallas_call(
        decoder_kernel,
        out_shape=jax.ShapeDtypeStruct((T, B, H), jnp.float32),
        in_specs=[_VMEM] * 8,
        out_specs=_VMEM,
    )(xw_dec, w_rec, enc, nmask, w_out, b_out, h0, c0)


# ----------------------------------------------------------------------------
# Parameter construction (deterministic, PyTorch-like uniform init).
# ----------------------------------------------------------------------------
def init_lstm(key, in_dim, hidden):
    k = 1.0 / jnp.sqrt(jnp.float32(hidden))
    k0, k1, k2, k3 = jax.random.split(key, 4)
    w_ih = jax.random.uniform(k0, (4 * hidden, in_dim), minval=-k, maxval=k)
    w_hh = jax.random.uniform(k1, (4 * hidden, hidden), minval=-k, maxval=k)
    b_ih = jax.random.uniform(k2, (4 * hidden,), minval=-k, maxval=k)
    b_hh = jax.random.uniform(k3, (4 * hidden,), minval=-k, maxval=k)
    # kernels take (In, 4H), (H, 4H), (1, 4H)
    return (w_ih.T.astype(jnp.float32), w_hh.T.astype(jnp.float32),
            (b_ih + b_hh)[None, :].astype(jnp.float32))


def init_linear(key, in_dim, out_dim):
    k = 1.0 / jnp.sqrt(jnp.float32(in_dim))
    k0, k1 = jax.random.split(key)
    w = jax.random.uniform(k0, (out_dim, in_dim), minval=-k, maxval=k)
    b = jax.random.uniform(k1, (out_dim,), minval=-k, maxval=k)
    return w.T.astype(jnp.float32), b[None, :].astype(jnp.float32)


def make_params(key, hsz, vsz, in_dim=300):
    h2 = hsz // 2
    ks = jax.random.split(key, 6)
    p = {}
    p["enc_fwd"] = init_lstm(ks[0], in_dim, h2)
    p["enc_bwd"] = init_lstm(ks[1], in_dim, h2)
    p["dec"] = init_lstm(ks[2], 2 * hsz, hsz)
    emb = jax.random.normal(ks[3], (vsz, hsz), dtype=jnp.float32) * 0.1
    p["emb"] = emb.at[0].set(0.0)                         # padding_idx=0
    p["linout"] = init_linear(ks[4], 2 * hsz, hsz)
    p["gen"] = init_linear(ks[5], hsz, vsz)
    return p


def _pad_axis(x, axis, size, value=0):
    pad = size - x.shape[axis]
    if pad <= 0:
        return x
    widths = [(0, 0)] * x.ndim
    widths[axis] = (0, pad)
    return jnp.pad(x, widths, constant_values=value)


# ----------------------------------------------------------------------------
# Full forward (teacher-forcing path; matches model.forward(inp, mask, out)).
# ----------------------------------------------------------------------------
def seq2seq_forward(params, inp, mask, out_tokens, hsz):
    B, S, _ = inp.shape
    T = out_tokens.shape[1]
    h2 = hsz // 2

    # ---- pad batch to a full sublane tile; padded rows are sliced off ------
    Bp = max(8, ((B + 7) // 8) * 8)
    inp_p = _pad_axis(inp, 0, Bp)
    mask_p = _pad_axis(mask, 0, Bp)
    out_p = _pad_axis(out_tokens, 0, Bp, value=1)

    wih_f, whh_f, b_f = params["enc_fwd"]
    wih_b, whh_b, b_b = params["enc_bwd"]
    wih_d, whh_d, b_d = params["dec"]
    w_out, b_out = params["linout"]
    w_gen, b_gen = params["gen"]
    emb = params["emb"]

    # ---- encoder: hoisted per-step input projections (one matmul each) -----
    xw_f = jnp.einsum("bsi,ig->sbg", inp_p, wih_f) + b_f          # (S, Bp, 4*h2)
    xw_b = jnp.einsum("bsi,ig->sbg", inp_p, wih_b) + b_b

    enc_f, enc_b, h0, c0 = run_encoder(xw_f, xw_b, whh_f, whh_b)

    # batch-major bidirectional encoder output for MXU attention: (Bp, S, hsz)
    enc = jnp.transpose(jnp.concatenate([enc_f, enc_b], axis=2), (1, 0, 2))

    # ---- decoder: hoisted embedding lookups + their input projection -------
    prev = jnp.concatenate(
        [jnp.full((1, Bp), 3, jnp.int32), out_p.T[:-1]], axis=0)   # (T, Bp)
    demb = jnp.take(emb, prev, axis=0)                             # (T, Bp, hsz)
    xw_dec = jnp.einsum("tbh,hg->tbg", demb, wih_d[:hsz]) + b_d    # (T, Bp, 4*hsz)
    w_rec = jnp.concatenate([wih_d[hsz:], whh_d], axis=0)          # (2*hsz, 4*hsz)

    # additive attention mask (1.0 = padded position -> large negative)
    nmask = (mask_p * jnp.float32(-1e9))[:, None, :]               # (Bp, 1, S)

    op_all = run_decoder(xw_dec, w_rec, enc, nmask, w_out, b_out, h0, c0)

    # ---- generator hoisted out of the serial decoder loop: one big matmul --
    logits = jnp.einsum("tbh,hv->tbv", op_all, w_gen) + b_gen      # (T, Bp, V)
    return jnp.transpose(logits[:, :B, :], (1, 0, 2))              # (B, T, V)


if __name__ == "__main__":
    B, S, T = 2, 8, 5
    HSZ, VSZ, IN_DIM = 32, 50, 300

    key = jax.random.PRNGKey(0)
    k_par, k_inp, k_out = jax.random.split(key, 3)

    params = make_params(k_par, HSZ, VSZ, IN_DIM)
    inp = jax.random.normal(k_inp, (B, S, IN_DIM), dtype=jnp.float32)
    # mask: 1.0 = padded position (filled with large-negative before softmax)
    mask = jnp.zeros((B, S), jnp.float32).at[1, 6:].set(1.0)
    out_toks = jax.random.randint(k_out, (B, T), 1, VSZ).astype(jnp.int32)

    fwd = jax.jit(seq2seq_forward, static_argnums=(4,))
    logits = fwd(params, inp, mask, out_toks, HSZ)
    logits = jax.block_until_ready(logits)

    assert logits.shape == (B, T, VSZ), logits.shape
    assert bool(jnp.all(jnp.isfinite(logits)))
    print("KERNEL_OK")
</pallas_src>

<mosaic_0001>
module attributes {stable_mosaic.version = 11 : i64} {
  func.func @encoder_kernel(%arg0: memref<8x8x64xf32, #tpu.memory_space<vmem>>, %arg1: memref<8x8x64xf32, #tpu.memory_space<vmem>>, %arg2: memref<16x64xf32, #tpu.memory_space<vmem>>, %arg3: memref<16x64xf32, #tpu.memory_space<vmem>>, %arg4: memref<8x8x16xf32, #tpu.memory_space<vmem>>, %arg5: memref<8x8x16xf32, #tpu.memory_space<vmem>>, %arg6: memref<8x32xf32, #tpu.memory_space<vmem>>, %arg7: memref<8x32xf32, #tpu.memory_space<vmem>>) attributes {dimension_semantics = [], scalar_prefetch = 0 : i64, scratch_operands = 0 : i64, tpu.core_type = #tpu.core_type<tc>} {
    %c0 = arith.constant 0 : index
    %c0_0 = arith.constant 0 : index
    %0 = vector.load %arg2[%c0, %c0_0] : memref<16x64xf32, #tpu.memory_space<vmem>>, vector<16x64xf32>
    %c0_1 = arith.constant 0 : index
    %c0_2 = arith.constant 0 : index
    %1 = vector.load %arg3[%c0_1, %c0_2] : memref<16x64xf32, #tpu.memory_space<vmem>>, vector<16x64xf32>
    %cst = arith.constant 0.000000e+00 : f32
    %2 = vector.broadcast %cst : f32 to vector<8x16xf32>
    %c0_i32 = arith.constant 0 : i32
    %c8_i32 = arith.constant 8 : i32
    %3 = arith.addi %c0_i32, %c8_i32 : i32
    %c1_i32 = arith.constant 1 : i32
    %4:4 = scf.for %arg8 = %c0_i32 to %3 step %c1_i32 iter_args(%arg9 = %2, %arg10 = %2, %arg11 = %2, %arg12 = %2) -> (vector<8x16xf32>, vector<8x16xf32>, vector<8x16xf32>, vector<8x16xf32>)  : i32 {
      %c7_i32 = arith.constant 7 : i32
      %9 = arith.subi %c7_i32, %arg8 : i32
      %10 = arith.index_cast %arg8 : i32 to index
      %c0_11 = arith.constant 0 : index
      %c0_12 = arith.constant 0 : index
      %11 = vector.load %arg0[%10, %c0_11, %c0_12] : memref<8x8x64xf32, #tpu.memory_space<vmem>>, vector<1x8x64xf32>
      %12 = vector.shape_cast %11 : vector<1x8x64xf32> to vector<8x64xf32>
      %cst_13 = arith.constant dense<0.000000e+00> : vector<8x64xf32>
      %13 = tpu.matmul %arg9, %0, %cst_13 {dimension_numbers = #tpu.dot_dimension_numbers<[1], [0], [0], [1], [0, 0, 1, 1], [], []>} : vector<8x16xf32>, vector<16x64xf32>, vector<8x64xf32> -> vector<8x64xf32>
      %14 = arith.addf %12, %13 : vector<8x64xf32>
      %15 = arith.index_cast %9 : i32 to index
      %c0_14 = arith.constant 0 : index
      %c0_15 = arith.constant 0 : index
      %16 = vector.load %arg1[%15, %c0_14, %c0_15] : memref<8x8x64xf32, #tpu.memory_space<vmem>>, vector<1x8x64xf32>
      %17 = vector.shape_cast %16 : vector<1x8x64xf32> to vector<8x64xf32>
      %cst_16 = arith.constant dense<0.000000e+00> : vector<8x64xf32>
      %18 = tpu.matmul %arg11, %1, %cst_16 {dimension_numbers = #tpu.dot_dimension_numbers<[1], [0], [0], [1], [0, 0, 1, 1], [], []>} : vector<8x16xf32>, vector<16x64xf32>, vector<8x64xf32> -> vector<8x64xf32>
      %19 = arith.addf %17, %18 : vector<8x64xf32>
      %20 = vector.extract_strided_slice %14 {offsets = [0, 0], sizes = [8, 16], strides = [1, 1]} : vector<8x64xf32> to vector<8x16xf32>
      %21 = arith.negf %20 : vector<8x16xf32>
      %22 = math.exp %21 : vector<8x16xf32>
      %cst_17 = arith.constant 1.000000e+00 : f32
      %23 = vector.broadcast %cst_17 : f32 to vector<8x16xf32>
      %24 = arith.addf %23, %22 : vector<8x16xf32>
      %25 = arith.divf %23, %24 : vector<8x16xf32>
      %26 = vector.extract_strided_slice %14 {offsets = [0, 16], sizes = [8, 16], strides = [1, 1]} : vector<8x64xf32> to vector<8x16xf32>
      %27 = arith.negf %26 : vector<8x16xf32>
      %28 = math.exp %27 : vector<8x16xf32>
      %cst_18 = arith.constant 1.000000e+00 : f32
      %29 = vector.broadcast %cst_18 : f32 to vector<8x16xf32>
      %30 = arith.addf %29, %28 : vector<8x16xf32>
      %31 = arith.divf %29, %30 : vector<8x16xf32>
      %32 = vector.extract_strided_slice %14 {offsets = [0, 32], sizes = [8, 16], strides = [1, 1]} : vector<8x64xf32> to vector<8x16xf32>
      %33 = math.tanh %32 : vector<8x16xf32>
      %34 = vector.extract_strided_slice %14 {offsets = [0, 48], sizes = [8, 16], strides = [1, 1]} : vector<8x64xf32> to vector<8x16xf32>
      %35 = arith.negf %34 : vector<8x16xf32>
      %36 = math.exp %35 : vector<8x16xf32>
      %cst_19 = arith.constant 1.000000e+00 : f32
      %37 = vector.broadcast %cst_19 : f32 to vector<8x16xf32>
      %38 = arith.addf %37, %36 : vector<8x16xf32>
      %39 = arith.divf %37, %38 : vector<8x16xf32>
      %40 = arith.mulf %31, %arg10 : vector<8x16xf32>
      %41 = arith.mulf %25, %33 : vector<8x16xf32>
      %42 = arith.addf %40, %41 : vector<8x16xf32>
      %43 = math.tanh %42 : vector<8x16xf32>
      %44 = arith.mulf %39, %43 : vector<8x16xf32>
      %45 = vector.extract_strided_slice %19 {offsets = [0, 0], sizes = [8, 16], strides = [1, 1]} : vector<8x64xf32> to vector<8x16xf32>
      %46 = arith.negf %45 : vector<8x16xf32>
      %47 = math.exp %46 : vector<8x16xf32>
      %cst_20 = arith.constant 1.000000e+00 : f32
      %48 = vector.broadcast %cst_20 : f32 to vector<8x16xf32>
      %49 = arith.addf %48, %47 : vector<8x16xf32>
      %50 = arith.divf %48, %49 : vector<8x16xf32>
      %51 = vector.extract_strided_slice %19 {offsets = [0, 16], sizes = [8, 16], strides = [1, 1]} : vector<8x64xf32> to vector<8x16xf32>
      %52 = arith.negf %51 : vector<8x16xf32>
      %53 = math.exp %52 : vector<8x16xf32>
      %cst_21 = arith.constant 1.000000e+00 : f32
      %54 = vector.broadcast %cst_21 : f32 to vector<8x16xf32>
      %55 = arith.addf %54, %53 : vector<8x16xf32>
      %56 = arith.divf %54, %55 : vector<8x16xf32>
      %57 = vector.extract_strided_slice %19 {offsets = [0, 32], sizes = [8, 16], strides = [1, 1]} : vector<8x64xf32> to vector<8x16xf32>
      %58 = math.tanh %57 : vector<8x16xf32>
      %59 = vector.extract_strided_slice %19 {offsets = [0, 48], sizes = [8, 16], strides = [1, 1]} : vector<8x64xf32> to vector<8x16xf32>
      %60 = arith.negf %59 : vector<8x16xf32>
      %61 = math.exp %60 : vector<8x16xf32>
      %cst_22 = arith.constant 1.000000e+00 : f32
      %62 = vector.broadcast %cst_22 : f32 to vector<8x16xf32>
      %63 = arith.addf %62, %61 : vector<8x16xf32>
      %64 = arith.divf %62, %63 : vector<8x16xf32>
      %65 = arith.mulf %56, %arg12 : vector<8x16xf32>
      %66 = arith.mulf %50, %58 : vector<8x16xf32>
      %67 = arith.addf %65, %66 : vector<8x16xf32>
      %68 = math.tanh %67 : vector<8x16xf32>
      %69 = arith.mulf %64, %68 : vector<8x16xf32>
      %70 = arith.index_cast %arg8 : i32 to index
      %c0_23 = arith.constant 0 : index
      %c0_24 = arith.constant 0 : index
      %71 = vector.load %arg4[%70, %c0_23, %c0_24] : memref<8x8x16xf32, #tpu.memory_space<vmem>>, vector<1x8x16xf32>
      %72 = vector.shape_cast %71 : vector<1x8x16xf32> to vector<8x16xf32>
      %73 = vector.shape_cast %44 : vector<8x16xf32> to vector<1x8x16xf32>
      tpu.vector_store %arg4[%70, %c0_23, %c0_24], %73 {strides = array<i32>} : memref<8x8x16xf32, #tpu.memory_space<vmem>>, vector<1x8x16xf32>,
      %74 = arith.index_cast %9 : i32 to index
      %c0_25 = arith.constant 0 : index
      %c0_26 = arith.constant 0 : index
      %75 = vector.load %arg5[%74, %c0_25, %c0_26] : memref<8x8x16xf32, #tpu.memory_space<vmem>>, vector<1x8x16xf32>
      %76 = vector.shape_cast %75 : vector<1x8x16xf32> to vector<8x16xf32>
      %77 = vector.shape_cast %69 : vector<8x16xf32> to vector<1x8x16xf32>
      tpu.vector_store %arg5[%74, %c0_25, %c0_26], %77 {strides = array<i32>} : memref<8x8x16xf32, #tpu.memory_space<vmem>>, vector<1x8x16xf32>,
      scf.yield %44, %42, %69, %67 : vector<8x16xf32>, vector<8x16xf32>, vector<8x16xf32>, vector<8x16xf32>
    }
    %c8_i32_3 = arith.constant 8 : i32
    %c0_4 = arith.constant 0 : index
    %c0_5 = arith.constant 0 : index
    %5 = vector.load %arg6[%c0_4, %c0_5] : memref<8x32xf32, #tpu.memory_space<vmem>>, vector<8x16xf32>
    tpu.vector_store %arg6[%c0_4, %c0_5], %4#0 {strides = array<i32>} : memref<8x32xf32, #tpu.memory_space<vmem>>, vector<8x16xf32>,
    %c0_6 = arith.constant 0 : index
    %c16 = arith.constant 16 : index
    %6 = vector.load %arg6[%c0_6, %c16] : memref<8x32xf32, #tpu.memory_space<vmem>>, vector<8x16xf32>
    tpu.vector_store %arg6[%c0_6, %c16], %4#2 {strides = array<i32>} : memref<8x32xf32, #tpu.memory_space<vmem>>, vector<8x16xf32>,
    %c0_7 = arith.constant 0 : index
    %c0_8 = arith.constant 0 : index
    %7 = vector.load %arg7[%c0_7, %c0_8] : memref<8x32xf32, #tpu.memory_space<vmem>>, vector<8x16xf32>
    tpu.vector_store %arg7[%c0_7, %c0_8], %4#1 {strides = array<i32>} : memref<8x32xf32, #tpu.memory_space<vmem>>, vector<8x16xf32>,
    %c0_9 = arith.constant 0 : index
    %c16_10 = arith.constant 16 : index
    %8 = vector.load %arg7[%c0_9, %c16_10] : memref<8x32xf32, #tpu.memory_space<vmem>>, vector<8x16xf32>
    tpu.vector_store %arg7[%c0_9, %c16_10], %4#3 {strides = array<i32>} : memref<8x32xf32, #tpu.memory_space<vmem>>, vector<8x16xf32>,
    return
  }
}

module attributes {stable_mosaic.version = 11 : i64} {
  func.func @decoder_kernel(%arg0: memref<5x8x128xf32, #tpu.memory_space<vmem>>, %arg1: memref<64x128xf32, #tpu.memory_space<vmem>>, %arg2: memref<8x8x32xf32, #tpu.memory_space<vmem>>, %arg3: memref<8x1x8xf32, #tpu.memory_space<vmem>>, %arg4: memref<64x32xf32, #tpu.memory_space<vmem>>, %arg5: memref<1x32xf32, #tpu.memory_space<vmem>>, %arg6: memref<8x32xf32, #tpu.memory_space<vmem>>, %arg7: memref<8x32xf32, #tpu.memory_space<vmem>>, %arg8: memref<5x8x32xf32, #tpu.memory_space<vmem>>) attributes {dimension_semantics = [], scalar_prefetch = 0 : i64, scratch_operands = 0 : i64, tpu.core_type = #tpu.core_type<tc>} {
    %c0 = arith.constant 0 : index
    %c0_0 = arith.constant 0 : index
    %0 = vector.load %arg1[%c0, %c0_0] : memref<64x128xf32, #tpu.memory_space<vmem>>, vector<64x128xf32>
    %c0_1 = arith.constant 0 : index
    %c0_2 = arith.constant 0 : index
    %c0_3 = arith.constant 0 : index
    %1 = vector.load %arg2[%c0_1, %c0_2, %c0_3] : memref<8x8x32xf32, #tpu.memory_space<vmem>>, vector<8x8x32xf32>
    %c0_4 = arith.constant 0 : index
    %c0_5 = arith.constant 0 : index
    %c0_6 = arith.constant 0 : index
    %2 = vector.load %arg3[%c0_4, %c0_5, %c0_6] : memref<8x1x8xf32, #tpu.memory_space<vmem>>, vector<8x1x8xf32>
    %c0_7 = arith.constant 0 : index
    %c0_8 = arith.constant 0 : index
    %3 = vector.load %arg4[%c0_7, %c0_8] : memref<64x32xf32, #tpu.memory_space<vmem>>, vector<32x32xf32>
    %c32 = arith.constant 32 : index
    %c0_9 = arith.constant 0 : index
    %4 = vector.load %arg4[%c32, %c0_9] : memref<64x32xf32, #tpu.memory_space<vmem>>, vector<32x32xf32>
    %c0_10 = arith.constant 0 : index
    %c0_11 = arith.constant 0 : index
    %5 = vector.load %arg5[%c0_10, %c0_11] : memref<1x32xf32, #tpu.memory_space<vmem>>, vector<1x32xf32>
    %c0_12 = arith.constant 0 : index
    %c0_13 = arith.constant 0 : index
    %6 = vector.load %arg6[%c0_12, %c0_13] : memref<8x32xf32, #tpu.memory_space<vmem>>, vector<8x32xf32>
    %c0_14 = arith.constant 0 : index
    %c0_15 = arith.constant 0 : index
    %7 = vector.load %arg7[%c0_14, %c0_15] : memref<8x32xf32, #tpu.memory_space<vmem>>, vector<8x32xf32>
    %cst = arith.constant 0.000000e+00 : f32
    %8 = vector.broadcast %cst : f32 to vector<8x32xf32>
    %c0_i32 = arith.constant 0 : i32
    %c5_i32 = arith.constant 5 : i32
    %9 = arith.addi %c0_i32, %c5_i32 : i32
    %c1_i32 = arith.constant 1 : i32
    %10:3 = scf.for %arg9 = %c0_i32 to %9 step %c1_i32 iter_args(%arg10 = %6, %arg11 = %7, %arg12 = %8) -> (vector<8x32xf32>, vector<8x32xf32>, vector<8x32xf32>)  : i32 {
      %11 = tpu.concatenate %arg12, %arg10 in 1 : vector<8x32xf32>, vector<8x32xf32> -> vector<8x64xf32>
      %12 = arith.index_cast %arg9 : i32 to index
      %c0_17 = arith.constant 0 : index
      %c0_18 = arith.constant 0 : index
      %13 = vector.load %arg0[%12, %c0_17, %c0_18] : memref<5x8x128xf32, #tpu.memory_space<vmem>>, vector<1x8x128xf32>
      %14 = vector.shape_cast %13 : vector<1x8x128xf32> to vector<8x128xf32>
      %cst_19 = arith.constant dense<0.000000e+00> : vector<8x128xf32>
      %15 = tpu.matmul %11, %0, %cst_19 {dimension_numbers = #tpu.dot_dimension_numbers<[1], [0], [0], [1], [0, 0, 1, 1], [], []>} : vector<8x64xf32>, vector<64x128xf32>, vector<8x128xf32> -> vector<8x128xf32>
      %16 = arith.addf %14, %15 : vector<8x128xf32>
      %17 = vector.extract_strided_slice %16 {offsets = [0, 0], sizes = [8, 32], strides = [1, 1]} : vector<8x128xf32> to vector<8x32xf32>
      %18 = arith.negf %17 : vector<8x32xf32>
      %19 = math.exp %18 : vector<8x32xf32>
      %cst_20 = arith.constant 1.000000e+00 : f32
      %20 = vector.broadcast %cst_20 : f32 to vector<8x32xf32>
      %21 = arith.addf %20, %19 : vector<8x32xf32>
      %22 = arith.divf %20, %21 : vector<8x32xf32>
      %23 = vector.extract_strided_slice %16 {offsets = [0, 32], sizes = [8, 32], strides = [1, 1]} : vector<8x128xf32> to vector<8x32xf32>
      %24 = arith.negf %23 : vector<8x32xf32>
      %25 = math.exp %24 : vector<8x32xf32>
      %cst_21 = arith.constant 1.000000e+00 : f32
      %26 = vector.broadcast %cst_21 : f32 to vector<8x32xf32>
      %27 = arith.addf %26, %25 : vector<8x32xf32>
      %28 = arith.divf %26, %27 : vector<8x32xf32>
      %29 = vector.extract_strided_slice %16 {offsets = [0, 64], sizes = [8, 32], strides = [1, 1]} : vector<8x128xf32> to vector<8x32xf32>
      %30 = math.tanh %29 : vector<8x32xf32>
      %31 = vector.extract_strided_slice %16 {offsets = [0, 96], sizes = [8, 32], strides = [1, 1]} : vector<8x128xf32> to vector<8x32xf32>
      %32 = arith.negf %31 : vector<8x32xf32>
      %33 = math.exp %32 : vector<8x32xf32>
      %cst_22 = arith.constant 1.000000e+00 : f32
      %34 = vector.broadcast %cst_22 : f32 to vector<8x32xf32>
      %35 = arith.addf %34, %33 : vector<8x32xf32>
      %36 = arith.divf %34, %35 : vector<8x32xf32>
      %37 = arith.mulf %28, %arg11 : vector<8x32xf32>
      %38 = arith.mulf %22, %30 : vector<8x32xf32>
      %39 = arith.addf %37, %38 : vector<8x32xf32>
      %40 = math.tanh %39 : vector<8x32xf32>
      %41 = arith.mulf %36, %40 : vector<8x32xf32>
      %42 = vector.shape_cast %41 : vector<8x32xf32> to vector<8x1x32xf32>
      "tpu.trace_start"() <{level = 10 : i32, message = "bqd,bsd->bqs"}> : () -> ()
      %cst_23 = arith.constant dense<0.000000e+00> : vector<8x1x8xf32>
      %43 = tpu.matmul %42, %1, %cst_23 {dimension_numbers = #tpu.dot_dimension_numbers<[2], [2], [1], [1], [0, 0, 0, 1, 1, 1], [0], [0]>} : vector<8x1x32xf32>, vector<8x8x32xf32>, vector<8x1x8xf32> -> vector<8x1x8xf32>
      "tpu.trace_stop"() : () -> ()
      %44 = arith.addf %43, %2 : vector<8x1x8xf32>
      %cst_24 = arith.constant dense<0xFF800000> : vector<8x1xf32>
      %45 = vector.multi_reduction <maximumf>, %44, %cst_24 [2] : vector<8x1x8xf32> to vector<8x1xf32>
      %46 = vector.shape_cast %45 : vector<8x1xf32> to vector<8x1x1xf32>
      %47 = vector.broadcast %46 : vector<8x1x1xf32> to vector<8x1x8xf32>
      %48 = arith.subf %44, %47 : vector<8x1x8xf32>
      %49 = math.exp %48 : vector<8x1x8xf32>
      %cst_25 = arith.constant dense<0.000000e+00> : vector<8x1xf32>
      %50 = vector.multi_reduction <add>, %49, %cst_25 [2] : vector<8x1x8xf32> to vector<8x1xf32>
      %51 = vector.shape_cast %50 : vector<8x1xf32> to vector<8x1x1xf32>
      %52 = tpu.reciprocal %51 {approx = true} : vector<8x1x1xf32> -> vector<8x1x1xf32>
      %53 = vector.broadcast %52 : vector<8x1x1xf32> to vector<8x1x8xf32>
      %54 = arith.mulf %49, %53 : vector<8x1x8xf32>
      "tpu.trace_start"() <{level = 10 : i32, message = "bqs,bsd->bqd"}> : () -> ()
      %cst_26 = arith.constant dense<0.000000e+00> : vector<8x1x32xf32>
      %55 = tpu.matmul %54, %1, %cst_26 {dimension_numbers = #tpu.dot_dimension_numbers<[2], [1], [1], [2], [0, 0, 0, 1, 1, 2], [0], [0]>} : vector<8x1x8xf32>, vector<8x8x32xf32>, vector<8x1x32xf32> -> vector<8x1x32xf32>
      "tpu.trace_stop"() : () -> ()
      %56 = vector.shape_cast %55 : vector<8x1x32xf32> to vector<8x32xf32>
      %cst_27 = arith.constant dense<0.000000e+00> : vector<8x32xf32>
      %57 = tpu.matmul %56, %3, %cst_27 {dimension_numbers = #tpu.dot_dimension_numbers<[1], [0], [0], [1], [0, 0, 1, 1], [], []>} : vector<8x32xf32>, vector<32x32xf32>, vector<8x32xf32> -> vector<8x32xf32>
      %cst_28 = arith.constant dense<0.000000e+00> : vector<8x32xf32>
      %58 = tpu.matmul %41, %4, %cst_28 {dimension_numbers = #tpu.dot_dimension_numbers<[1], [0], [0], [1], [0, 0, 1, 1], [], []>} : vector<8x32xf32>, vector<32x32xf32>, vector<8x32xf32> -> vector<8x32xf32>
      %59 = arith.addf %57, %58 : vector<8x32xf32>
      %60 = vector.broadcast %5 : vector<1x32xf32> to vector<8x32xf32>
      %61 = arith.addf %59, %60 : vector<8x32xf32>
      %62 = math.tanh %61 : vector<8x32xf32>
      %63 = arith.index_cast %arg9 : i32 to index
      %c0_29 = arith.constant 0 : index
      %c0_30 = arith.constant 0 : index
      %64 = vector.load %arg8[%63, %c0_29, %c0_30] : memref<5x8x32xf32, #tpu.memory_space<vmem>>, vector<1x8x32xf32>
      %65 = vector.shape_cast %64 : vector<1x8x32xf32> to vector<8x32xf32>
      %66 = vector.shape_cast %62 : vector<8x32xf32> to vector<1x8x32xf32>
      tpu.vector_store %arg8[%63, %c0_29, %c0_30], %66 {strides = array<i32>} : memref<5x8x32xf32, #tpu.memory_space<vmem>>, vector<1x8x32xf32>,
      scf.yield %41, %39, %62 : vector<8x32xf32>, vector<8x32xf32>, vector<8x32xf32>
    }
    %c5_i32_16 = arith.constant 5 : i32
    return
  }
}

</mosaic_0001>

<llo_original>
// kernel: seq2seq_forward.2
$region0: #{seq2seq_forward.2}
  #allocation0 [shape = 'u32[]', space=smem, size = 0x4, offset = 0x4, fixed_abs, tag = 'smem constant byte address 0x4 - core index']
  #allocation1 [shape = 'u32[144,128]{1,0:T(1,128)}', space=vmem, size = 0x12000, scoped, tag = 'internal scratch']
  %s0 = inlined_call_operand.vmem [shape: f32[8,8,64], index: 0, kind: input, shape index: {}]
  %s1 = inlined_call_operand.vmem [shape: f32[8,8,64], index: 1, kind: input, shape index: {}]
  %s2 = inlined_call_operand.vmem [shape: f32[16,64], index: 2, kind: input, shape index: {}]
  %s3 = inlined_call_operand.vmem [shape: f32[16,64], index: 3, kind: input, shape index: {}]
  %s4 = inlined_call_operand.vmem [shape: f32[8,8,16], index: 4, kind: output, shape index: {0}]
  %s5 = inlined_call_operand.vmem [shape: f32[8,8,16], index: 5, kind: output, shape index: {1}]
  %s6 = inlined_call_operand.vmem [shape: f32[8,32], index: 6, kind: output, shape index: {2}]
  %s7 = inlined_call_operand.vmem [shape: f32[8,32], index: 7, kind: output, shape index: {3}]
  %8 = xla_tuple %s4, %s5, %s6, %s7
  %s9 = sld [smem:[#allocation0]]
  $region57: #{seq2seq_forward.2} parent=0
    _
  %s11 = ssub.s32 1, %s9
  %s12 = scalar_select 0, %s11, %s9
  // Predicated region
  $region2: #{seq2seq_forward.2} parent=0 // pred_check
    _
  $region3: #{seq2seq_forward.2} parent=0 // pred_check_branch
    %14 = sbr.rel (0) target = $region5
  $region4: #{seq2seq_forward.2} parent=0 // pred_region
    _
  $region5: #{seq2seq_forward.2} parent=0 // pred_fallthru
    _
  // Predicated region
  $region6: #{seq2seq_forward.2} parent=0 // pred_check
    _
  $region7: #{seq2seq_forward.2} parent=0 // pred_check_branch
    %16 = sbr.rel (0) target = $region9
  $region8: #{seq2seq_forward.2} parent=0 // pred_region
    _
  $region9: #{seq2seq_forward.2} parent=0 // pred_fallthru
    _
  // Predicated region
  $region10: #{seq2seq_forward.2} parent=0 // pred_check
    _
  $region11: #{seq2seq_forward.2} parent=0 // pred_check_branch
    %18 = sbr.rel (0) target = $region13
  $region12: #{seq2seq_forward.2} parent=0 // pred_region
    _
  $region13: #{seq2seq_forward.2} parent=0 // pred_fallthru
    _
  // Predicated region
  $region14: #{seq2seq_forward.2} parent=0 // pred_check
    _
  $region15: #{seq2seq_forward.2} parent=0 // pred_check_branch
    %20 = sbr.rel (0) target = $region17
  $region16: #{seq2seq_forward.2} parent=0 // pred_region
    _
  $region17: #{seq2seq_forward.2} parent=0 // pred_fallthru
    _
  %v21 = vld [vmem:[%s2] sm:$0xff]
  %v22 = vld [vmem:[%s2 + $0x8] sm:$0xff]
  %v23 = vld [vmem:[%s3] sm:$0xff]
  %v24 = vld [vmem:[%s3 + $0x8] sm:$0xff]
  loop: start=0, step=1, limit=8
  $region18: #{seq2seq_forward.2} parent=0 // loop_pre_header
    _
  $region19: #{seq2seq_forward.2} parent=0 // loop_header
    %s26 = sphi 0, %s30
    %p27 = scmp.ge.s32.totalorder %s26, 8
    %v31 = vphi 0.0, %v218
    %v32 = vphi 0.0, %v212
    %v33 = vphi 0.0, %v242
    %v34 = vphi 0.0, %v236
  $region20: #{seq2seq_forward.2} parent=0 // loop_header_branch
    %29 = sbr.rel (%p27) target = $region24
  $region21: #{seq2seq_forward.2} parent=0 // loop_body
    %s35 = ssub.s32 7, %s26
    %s36 = smul.u32 %s26, 8
    %s37 = scalar_lea.vmem %s0, %s36
    %v38 = vld [vmem:[%s37] sm:$0xff]
    %40 = vrot.lane.b32.xlu0 %v31, 80
    %v41 = vpop.permute.xlu0 %40
    %vm42 = vcmask 130048
    %v43 = vsel %vm42, %v41, 0
    %45 = vmatprep.subr.mxu0 0.0
    %46 = vmatpush1.msra.mxu0 %v21
    %47 = vmatprep.subr.mxu0 0.0
    %48 = vmatpush1.msra.mxu0 %v22
    %49 = vmatprep.subr.mxu0 0.0
    %50 = vmatpush1.msra.mxu0 0.0
    %51 = vmatprep.subr.mxu0 0.0
    %52 = vmatpush1.msra.mxu0 0.0
    %53 = vmatprep.subr.mxu0 0.0
    %54 = vmatpush1.msra.mxu0 0.0
    %55 = vmatprep.subr.mxu0 0.0
    %56 = vmatpush1.msra.mxu0 0.0
    %57 = vmatprep.subr.mxu0 0.0
    %58 = vmatpush1.msra.mxu0 0.0
    %59 = vmatprep.subr.mxu0 0.0
    %60 = vmatpush1.msra.mxu0 0.0
    %61 = vmatprep.subr.mxu0 0.0
    %62 = vmatpush1.msra.mxu0 0.0
    %63 = vmatprep.subr.mxu0 0.0
    %64 = vmatpush1.msra.mxu0 0.0
    %65 = vmatprep.subr.mxu0 0.0
    %66 = vmatpush1.msra.mxu0 0.0
    %67 = vmatprep.subr.mxu0 0.0
    %68 = vmatpush1.msra.mxu0 0.0
    %69 = vmatprep.subr.mxu0 0.0
    %70 = vmatpush1.msra.mxu0 0.0
    %71 = vmatprep.subr.mxu0 0.0
    %72 = vmatpush1.msra.mxu0 0.0
    %73 = vmatprep.subr.mxu0 0.0
    %74 = vmatpush1.msra.mxu0 0.0
    %75 = vmatprep.subr.mxu0 0.0
    %76 = vmatpush1.msra.mxu0 0.0
    %77 = vmatprep.subr.mxu0 0.0
    %78 = vmatpush1.msra.mxu0 0.0
    %79 = vmatprep.subr.mxu0 0.0
    %80 = vmatpush1.msra.mxu0 0.0
    %81 = vmatprep.subr.mxu0 0.0
    %82 = vmatpush1.msra.mxu0 0.0
    %83 = vmatprep.subr.mxu0 0.0
    %84 = vmatpush1.msra.mxu0 0.0
    %85 = vmatprep.subr.mxu0 0.0
    %86 = vmatpush1.msra.mxu0 0.0
    %87 = vmatprep.subr.mxu0 0.0
    %88 = vmatpush1.msra.mxu0 0.0
    %89 = vmatprep.subr.mxu0 0.0
    %90 = vmatpush1.msra.mxu0 0.0
    %91 = vmatprep.subr.mxu0 0.0
    %92 = vmatpush1.msra.mxu0 0.0
    %93 = vmatprep.subr.mxu0 0.0
    %94 = vmatpush1.msra.mxu0 0.0
    %95 = vmatprep.subr.mxu0 0.0
    %96 = vmatpush1.msra.mxu0 0.0
    %97 = vmatprep.subr.mxu0 0.0
    %98 = vmatpush1.msra.mxu0 0.0
    %99 = vmatprep.subr.mxu0 0.0
    %100 = vmatpush1.msra.mxu0 0.0
    %101 = vmatprep.subr.mxu0 0.0
    %102 = vmatpush1.msra.mxu0 0.0
    %103 = vmatprep.subr.mxu0 0.0
    %104 = vmatpush1.msra.mxu0 0.0
    %105 = vmatprep.subr.mxu0 0.0
    %106 = vmatpush1.msra.mxu0 0.0
    %107 = vmatprep.subr.mxu0 0.0
    %108 = vmatpush1.msra.mxu0 0.0
    %109 = vmatprep.mubr.f32.mxu0 0.0
    %110 = vmatmul.mubr.f32.gmra.mrb[0].mxu0 %v43
    %v111 = vpop.f32.mrb[0].mxu0
    %v112 = vadd.f32 0.0, %v111
    %v113 = vpop.f32.mrb[0].mxu0
    %114 = vdwg.mxu0
    %v115 = vadd.f32 %v38, %v112
    %s116 = smul.u32 %s35, 8
    %s117 = scalar_lea.vmem %s1, %s116
    %v118 = vld [vmem:[%s117] sm:$0xff]
    %120 = vrot.lane.b32.xlu0 %v33, 80
    %v121 = vpop.permute.xlu0 %120
    %v122 = vsel %vm42, %v121, 0
    %124 = vmatprep.subr.mxu0 0.0
    %125 = vmatpush1.msra.mxu0 %v23
    %126 = vmatprep.subr.mxu0 0.0
    %127 = vmatpush1.msra.mxu0 %v24
    %128 = vmatprep.subr.mxu0 0.0
    %129 = vmatpush1.msra.mxu0 0.0
    %130 = vmatprep.subr.mxu0 0.0
    %131 = vmatpush1.msra.mxu0 0.0
    %132 = vmatprep.subr.mxu0 0.0
    %133 = vmatpush1.msra.mxu0 0.0
    %134 = vmatprep.subr.mxu0 0.0
    %135 = vmatpush1.msra.mxu0 0.0
    %136 = vmatprep.subr.mxu0 0.0
    %137 = vmatpush1.msra.mxu0 0.0
    %138 = vmatprep.subr.mxu0 0.0
    %139 = vmatpush1.msra.mxu0 0.0
    %140 = vmatprep.subr.mxu0 0.0
    %141 = vmatpush1.msra.mxu0 0.0
    %142 = vmatprep.subr.mxu0 0.0
    %143 = vmatpush1.msra.mxu0 0.0
    %144 = vmatprep.subr.mxu0 0.0
    %145 = vmatpush1.msra.mxu0 0.0
    %146 = vmatprep.subr.mxu0 0.0
    %147 = vmatpush1.msra.mxu0 0.0
    %148 = vmatprep.subr.mxu0 0.0
    %149 = vmatpush1.msra.mxu0 0.0
    %150 = vmatprep.subr.mxu0 0.0
    %151 = vmatpush1.msra.mxu0 0.0
    %152 = vmatprep.subr.mxu0 0.0
    %153 = vmatpush1.msra.mxu0 0.0
    %154 = vmatprep.subr.mxu0 0.0
    %155 = vmatpush1.msra.mxu0 0.0
    %156 = vmatprep.subr.mxu0 0.0
    %157 = vmatpush1.msra.mxu0 0.0
    %158 = vmatprep.subr.mxu0 0.0
    %159 = vmatpush1.msra.mxu0 0.0
    %160 = vmatprep.subr.mxu0 0.0
    %161 = vmatpush1.msra.mxu0 0.0
    %162 = vmatprep.subr.mxu0 0.0
    %163 = vmatpush1.msra.mxu0 0.0
    %164 = vmatprep.subr.mxu0 0.0
    %165 = vmatpush1.msra.mxu0 0.0
    %166 = vmatprep.subr.mxu0 0.0
    %167 = vmatpush1.msra.mxu0 0.0
    %168 = vmatprep.subr.mxu0 0.0
    %169 = vmatpush1.msra.mxu0 0.0
    %170 = vmatprep.subr.mxu0 0.0
    %171 = vmatpush1.msra.mxu0 0.0
    %172 = vmatprep.subr.mxu0 0.0
    %173 = vmatpush1.msra.mxu0 0.0
    %174 = vmatprep.subr.mxu0 0.0
    %175 = vmatpush1.msra.mxu0 0.0
    %176 = vmatprep.subr.mxu0 0.0
    %177 = vmatpush1.msra.mxu0 0.0
    %178 = vmatprep.subr.mxu0 0.0
    %179 = vmatpush1.msra.mxu0 0.0
    %180 = vmatprep.subr.mxu0 0.0
    %181 = vmatpush1.msra.mxu0 0.0
    %182 = vmatprep.subr.mxu0 0.0
    %183 = vmatpush1.msra.mxu0 0.0
    %184 = vmatprep.subr.mxu0 0.0
    %185 = vmatpush1.msra.mxu0 0.0
    %186 = vmatprep.subr.mxu0 0.0
    %187 = vmatpush1.msra.mxu0 0.0
    %188 = vmatprep.mubr.f32.mxu0 0.0
    %189 = vmatmul.mubr.f32.gmra.mrb[0].mxu0 %v122
    %v190 = vpop.f32.mrb[0].mxu0
    %v191 = vadd.f32 0.0, %v190
    %v192 = vpop.f32.mrb[0].mxu0
    %193 = vdwg.mxu0
    %v194 = vadd.f32 %v118, %v191
    %v195 = vxor.u32 %v115, 2147483648
    %v196 = vmul.f32 %v195, 1.442695
    %v197 = vpow.pop %v196
    %v198 = vadd.f32 %v197, 1.0
    %v199 = vrcp.pop %v198
    %v200 = vmul.f32 1.0, %v199
    %v201 = vtanh.pop %v115
    %v202 = vmul.f32 %v200, %v32
    %204 = vrot.lane.b32.xlu0 %v201, 96
    %v205 = vpop.permute.xlu0 %204
    %v207 = vmul.f32 %v200, %v205
    %209 = vrot.lane.b32.xlu0 %v207, 16
    %v210 = vpop.permute.xlu0 %209
    %v212 = vadd.f32 %v202, %v210
    %v213 = vtanh.pop %v212
    %215 = vrot.lane.b32.xlu0 %v213, 32
    %v216 = vpop.permute.xlu0 %215
    %v218 = vmul.f32 %v200, %v216
    %v219 = vxor.u32 %v194, 2147483648
    %v220 = vmul.f32 %v219, 1.442695
    %v221 = vpow.pop %v220
    %v222 = vadd.f32 %v221, 1.0
    %v223 = vrcp.pop %v222
    %v224 = vmul.f32 1.0, %v223
    %v225 = vtanh.pop %v194
    %v226 = vmul.f32 %v224, %v34
    %228 = vrot.lane.b32.xlu0 %v225, 96
    %v229 = vpop.permute.xlu0 %228
    %v231 = vmul.f32 %v224, %v229
    %233 = vrot.lane.b32.xlu0 %v231, 16
    %v234 = vpop.permute.xlu0 %233
    %v236 = vadd.f32 %v226, %v234
    %v237 = vtanh.pop %v236
    %239 = vrot.lane.b32.xlu0 %v237, 32
    %v240 = vpop.permute.xlu0 %239
    %v242 = vmul.f32 %v224, %v240
    %244 = vrot.lane.b32.xlu0 %v218, 80
    %v245 = vpop.permute.xlu0 %244
    %s247 = scalar_lea.vmem %s4, %s36
    %248 = vst.msk [vmem:[%s247] sm:$0xff] %vm42, %v245
    %250 = vrot.lane.b32.xlu0 %v242, 80
    %v251 = vpop.permute.xlu0 %250
    %s253 = scalar_lea.vmem %s5, %s116
    %254 = vst.msk [vmem:[%s253] sm:$0xff] %vm42, %v251
  $region22: #{seq2seq_forward.2} parent=0 // loop_footer
    %s30 = sadd.s32 1, %s26
  $region23: #{seq2seq_forward.2} parent=0 // loop_footer_branch
    %25 = sbr.rel target = $region19
  $region24: #{seq2seq_forward.2} parent=0 // loop_exit
    _
  %256 = vrot.lane.b32.xlu0 %v31, 80
  %v257 = vpop.permute.xlu0 %256
  %vm259 = vcmask 130048
  %260 = vst.msk [vmem:[%s6] sm:$0xff] %vm259, %v257
  %262 = vrot.lane.b32.xlu0 %v33, 96
  %v263 = vpop.permute.xlu0 %262
  %vm265 = vcmask 261248
  %266 = vst.msk [vmem:[%s6] sm:$0xff] %vm265, %v263
  %268 = vrot.lane.b32.xlu0 %v32, 112
  %v269 = vpop.permute.xlu0 %268
  %271 = vst.msk [vmem:[%s7] sm:$0xff] %vm259, %v269
  %272 = vst.msk [vmem:[%s7] sm:$0xff] %vm265, %v34
  // Predicated region
  $region25: #{seq2seq_forward.2} parent=0 // pred_check
    _
  $region26: #{seq2seq_forward.2} parent=0 // pred_check_branch
    %274 = sbr.rel (0) target = $region28
  $region27: #{seq2seq_forward.2} parent=0 // pred_region
    _
  $region28: #{seq2seq_forward.2} parent=0 // pred_fallthru
    _
  // Predicated region
  $region29: #{seq2seq_forward.2} parent=0 // pred_check
    _
  $region30: #{seq2seq_forward.2} parent=0 // pred_check_branch
    %276 = sbr.rel (0) target = $region32
  $region31: #{seq2seq_forward.2} parent=0 // pred_region
    _
  $region32: #{seq2seq_forward.2} parent=0 // pred_fallthru
    _
  // Predicated region
  $region33: #{seq2seq_forward.2} parent=0 // pred_check
    _
  $region34: #{seq2seq_forward.2} parent=0 // pred_check_branch
    %278 = sbr.rel (0) target = $region36
  $region35: #{seq2seq_forward.2} parent=0 // pred_region
    _
  $region36: #{seq2seq_forward.2} parent=0 // pred_fallthru
    _
  // Predicated region
  $region37: #{seq2seq_forward.2} parent=0 // pred_check
    _
  $region38: #{seq2seq_forward.2} parent=0 // pred_check_branch
    %280 = sbr.rel (0) target = $region40
  $region39: #{seq2seq_forward.2} parent=0 // pred_region
    _
  $region40: #{seq2seq_forward.2} parent=0 // pred_fallthru
    _
  // Predicated region
  $region41: #{seq2seq_forward.2} parent=0 // pred_check
    _
  $region42: #{seq2seq_forward.2} parent=0 // pred_check_branch
    %282 = sbr.rel (0) target = $region44
  $region43: #{seq2seq_forward.2} parent=0 // pred_region
    _
  $region44: #{seq2seq_forward.2} parent=0 // pred_fallthru
    _
  // Predicated region
  $region45: #{seq2seq_forward.2} parent=0 // pred_check
    _
  $region46: #{seq2seq_forward.2} parent=0 // pred_check_branch
    %284 = sbr.rel (0) target = $region48
  $region47: #{seq2seq_forward.2} parent=0 // pred_region
    _
  $region48: #{seq2seq_forward.2} parent=0 // pred_fallthru
    _
  // Predicated region
  $region49: #{seq2seq_forward.2} parent=0 // pred_check
    _
  $region50: #{seq2seq_forward.2} parent=0 // pred_check_branch
    %286 = sbr.rel (0) target = $region52
  $region51: #{seq2seq_forward.2} parent=0 // pred_region
    _
  $region52: #{seq2seq_forward.2} parent=0 // pred_fallthru
    _
  // Predicated region
  $region53: #{seq2seq_forward.2} parent=0 // pred_check
    _
  $region54: #{seq2seq_forward.2} parent=0 // pred_check_branch
    %288 = sbr.rel (0) target = $region56
  $region55: #{seq2seq_forward.2} parent=0 // pred_region
    _
  $region56: #{seq2seq_forward.2} parent=0 // pred_fallthru
    _

// kernel: seq2seq_forward.3
$region0: #{seq2seq_forward.3}
  #allocation0 [shape = 'u32[]', space=smem, size = 0x4, offset = 0x4, fixed_abs, tag = 'smem constant byte address 0x4 - core index']
  #allocation1 [shape = 'u32[144,128]{1,0:T(1,128)}', space=vmem, size = 0x12000, scoped, tag = 'internal scratch']
  %s0 = inlined_call_operand.vmem [shape: f32[5,8,128], index: 0, kind: input, shape index: {}]
  %s1 = inlined_call_operand.vmem [shape: f32[64,128], index: 1, kind: input, shape index: {}]
  %s2 = inlined_call_operand.vmem [shape: f32[8,8,32], index: 2, kind: input, shape index: {}]
  %s3 = inlined_call_operand.vmem [shape: f32[8,1,8], index: 3, kind: input, shape index: {}]
  %s4 = inlined_call_operand.vmem [shape: f32[64,32], index: 4, kind: input, shape index: {}]
  %s5 = inlined_call_operand.vmem [shape: f32[1,32], index: 5, kind: input, shape index: {}]
  %s6 = inlined_call_operand.vmem [shape: f32[8,32], index: 6, kind: input, shape index: {}]
  %s7 = inlined_call_operand.vmem [shape: f32[8,32], index: 7, kind: input, shape index: {}]
  %s8 = inlined_call_operand.vmem [shape: f32[5,8,32], index: 8, kind: output, shape index: {}]
  %s9 = sld [smem:[#allocation0]]
  $region49: #{seq2seq_forward.3} parent=0
    _
  %s11 = ssub.s32 1, %s9
  %s12 = scalar_select 0, %s11, %s9
  // Predicated region
  $region2: #{seq2seq_forward.3} parent=0 // pred_check
    _
  $region3: #{seq2seq_forward.3} parent=0 // pred_check_branch
    %14 = sbr.rel (0) target = $region5
  $region4: #{seq2seq_forward.3} parent=0 // pred_region
    _
  $region5: #{seq2seq_forward.3} parent=0 // pred_fallthru
    _
  // Predicated region
  $region6: #{seq2seq_forward.3} parent=0 // pred_check
    _
  $region7: #{seq2seq_forward.3} parent=0 // pred_check_branch
    %16 = sbr.rel (0) target = $region9
  $region8: #{seq2seq_forward.3} parent=0 // pred_region
    _
  $region9: #{seq2seq_forward.3} parent=0 // pred_fallthru
    _
  // Predicated region
  $region10: #{seq2seq_forward.3} parent=0 // pred_check
    _
  $region11: #{seq2seq_forward.3} parent=0 // pred_check_branch
    %18 = sbr.rel (0) target = $region13
  $region12: #{seq2seq_forward.3} parent=0 // pred_region
    _
  $region13: #{seq2seq_forward.3} parent=0 // pred_fallthru
    _
  // Predicated region
  $region14: #{seq2seq_forward.3} parent=0 // pred_check
    _
  $region15: #{seq2seq_forward.3} parent=0 // pred_check_branch
    %20 = sbr.rel (0) target = $region17
  $region16: #{seq2seq_forward.3} parent=0 // pred_region
    _
  $region17: #{seq2seq_forward.3} parent=0 // pred_fallthru
    _
  // Predicated region
  $region18: #{seq2seq_forward.3} parent=0 // pred_check
    _
  $region19: #{seq2seq_forward.3} parent=0 // pred_check_branch
    %22 = sbr.rel (0) target = $region21
  $region20: #{seq2seq_forward.3} parent=0 // pred_region
    _
  $region21: #{seq2seq_forward.3} parent=0 // pred_fallthru
    _
  // Predicated region
  $region22: #{seq2seq_forward.3} parent=0 // pred_check
    _
  $region23: #{seq2seq_forward.3} parent=0 // pred_check_branch
    %24 = sbr.rel (0) target = $region25
  $region24: #{seq2seq_forward.3} parent=0 // pred_region
    _
  $region25: #{seq2seq_forward.3} parent=0 // pred_fallthru
    _
  // Predicated region
  $region26: #{seq2seq_forward.3} parent=0 // pred_check
    _
  $region27: #{seq2seq_forward.3} parent=0 // pred_check_branch
    %26 = sbr.rel (0) target = $region29
  $region28: #{seq2seq_forward.3} parent=0 // pred_region
    _
  $region29: #{seq2seq_forward.3} parent=0 // pred_fallthru
    _
  // Predicated region
  $region30: #{seq2seq_forward.3} parent=0 // pred_check
    _
  $region31: #{seq2seq_forward.3} parent=0 // pred_check_branch
    %28 = sbr.rel (0) target = $region33
  $region32: #{seq2seq_forward.3} parent=0 // pred_region
    _
  $region33: #{seq2seq_forward.3} parent=0 // pred_fallthru
    _
  %v29 = vld [vmem:[%s1] sm:$0xff]
  %v30 = vld [vmem:[%s1 + $0x8] sm:$0xff]
  %v31 = vld [vmem:[%s1 + $0x10] sm:$0xff]
  %v32 = vld [vmem:[%s1 + $0x18] sm:$0xff]
  %v33 = vld [vmem:[%s1 + $0x20] sm:$0xff]
  %v34 = vld [vmem:[%s1 + $0x28] sm:$0xff]
  %v35 = vld [vmem:[%s1 + $0x30] sm:$0xff]
  %v36 = vld [vmem:[%s1 + $0x38] sm:$0xff]
  %v37 = vld [vmem:[%s2] sm:$0xff]
  %v38 = vld [vmem:[%s2 + $0x8] sm:$0xff]
  %v39 = vld [vmem:[%s2 + $0x10] sm:$0xff]
  %v40 = vld [vmem:[%s2 + $0x18] sm:$0xff]
  %v41 = vld [vmem:[%s2 + $0x20] sm:$0xff]
  %v42 = vld [vmem:[%s2 + $0x28] sm:$0xff]
  %v43 = vld [vmem:[%s2 + $0x30] sm:$0xff]
  %v44 = vld [vmem:[%s2 + $0x38] sm:$0xff]
  %v45 = vld [vmem:[%s3] sm:$0x1]
  %v46 = vld [vmem:[%s3 + $0x1] sm:$0x1]
  %v47 = vld [vmem:[%s3 + $0x2] sm:$0x1]
  %v48 = vld [vmem:[%s3 + $0x3] sm:$0x1]
  %v49 = vld [vmem:[%s3 + $0x4] sm:$0x1]
  %v50 = vld [vmem:[%s3 + $0x5] sm:$0x1]
  %v51 = vld [vmem:[%s3 + $0x6] sm:$0x1]
  %v52 = vld [vmem:[%s3 + $0x7] sm:$0x1]
  %v53 = vld [vmem:[%s4] sm:$0xff]
  %v54 = vld [vmem:[%s4 + $0x8] sm:$0xff]
  %v55 = vld [vmem:[%s4 + $0x10] sm:$0xff]
  %v56 = vld [vmem:[%s4 + $0x18] sm:$0xff]
  %v57 = vld [vmem:[%s4 + $0x20] sm:$0xff]
  %v58 = vld [vmem:[%s4 + $0x28] sm:$0xff]
  %v59 = vld [vmem:[%s4 + $0x30] sm:$0xff]
  %v60 = vld [vmem:[%s4 + $0x38] sm:$0xff]
  %v61 = vld [vmem:[%s5] sm:$0x1]
  %v62 = vld [vmem:[%s6] sm:$0xff]
  %v63 = vld [vmem:[%s7] sm:$0xff]
  loop: start=0, step=1, limit=5
  $region34: #{seq2seq_forward.3} parent=0 // loop_pre_header
    _
  $region35: #{seq2seq_forward.3} parent=0 // loop_header
    %s65 = sphi 0, %s69
    %p66 = scmp.ge.s32.totalorder %s65, 5
    %v70 = vphi %v62, %v1558
    %v71 = vphi %v63, %v1745
    %v72 = vphi 0.0, %v1739
  $region36: #{seq2seq_forward.3} parent=0 // loop_header_branch
    %68 = sbr.rel (%p66) target = $region40
  $region37: #{seq2seq_forward.3} parent=0 // loop_body
    %74 = vrot.lane.b32.xlu0 %v70, 32
    %v75 = vpop.permute.xlu0 %74
    %vm77 = vcmask 261120
    %v78 = vsel %vm77, %v72, %v75
    %s79 = smul.u32 %s65, 8
    %s80 = scalar_lea.vmem %s0, %s79
    %v81 = vld [vmem:[%s80] sm:$0xff]
    %vm82 = vcmask 523264
    %v84 = vsel %vm82, %v78, 0
    %86 = vmatprep.subr.mxu0 0.0
    %87 = vmatpush1.msra.mxu0 %v29
    %88 = vmatprep.subr.mxu0 0.0
    %89 = vmatpush1.msra.mxu0 %v30
    %90 = vmatprep.subr.mxu0 0.0
    %91 = vmatpush1.msra.mxu0 %v31
    %92 = vmatprep.subr.mxu0 0.0
    %93 = vmatpush1.msra.mxu0 %v32
    %94 = vmatprep.subr.mxu0 0.0
    %95 = vmatpush1.msra.mxu0 %v33
    %96 = vmatprep.subr.mxu0 0.0
    %97 = vmatpush1.msra.mxu0 %v34
    %98 = vmatprep.subr.mxu0 0.0
    %99 = vmatpush1.msra.mxu0 %v35
    %100 = vmatprep.subr.mxu0 0.0
    %101 = vmatpush1.msra.mxu0 %v36
    %102 = vmatprep.subr.mxu0 0.0
    %103 = vmatpush1.msra.mxu0 0.0
    %104 = vmatprep.subr.mxu0 0.0
    %105 = vmatpush1.msra.mxu0 0.0
    %106 = vmatprep.subr.mxu0 0.0
    %107 = vmatpush1.msra.mxu0 0.0
    %108 = vmatprep.subr.mxu0 0.0
    %109 = vmatpush1.msra.mxu0 0.0
    %110 = vmatprep.subr.mxu0 0.0
    %111 = vmatpush1.msra.mxu0 0.0
    %112 = vmatprep.subr.mxu0 0.0
    %113 = vmatpush1.msra.mxu0 0.0
    %114 = vmatprep.subr.mxu0 0.0
    %115 = vmatpush1.msra.mxu0 0.0
    %116 = vmatprep.subr.mxu0 0.0
    %117 = vmatpush1.msra.mxu0 0.0
    %118 = vmatprep.subr.mxu0 0.0
    %119 = vmatpush1.msra.mxu0 0.0
    %120 = vmatprep.subr.mxu0 0.0
    %121 = vmatpush1.msra.mxu0 0.0
    %122 = vmatprep.subr.mxu0 0.0
    %123 = vmatpush1.msra.mxu0 0.0
    %124 = vmatprep.subr.mxu0 0.0
    %125 = vmatpush1.msra.mxu0 0.0
    %126 = vmatprep.subr.mxu0 0.0
    %127 = vmatpush1.msra.mxu0 0.0
    %128 = vmatprep.subr.mxu0 0.0
    %129 = vmatpush1.msra.mxu0 0.0
    %130 = vmatprep.subr.mxu0 0.0
    %131 = vmatpush1.msra.mxu0 0.0
    %132 = vmatprep.subr.mxu0 0.0
    %133 = vmatpush1.msra.mxu0 0.0
    %134 = vmatprep.subr.mxu0 0.0
    %135 = vmatpush1.msra.mxu0 0.0
    %136 = vmatprep.subr.mxu0 0.0
    %137 = vmatpush1.msra.mxu0 0.0
    %138 = vmatprep.subr.mxu0 0.0
    %139 = vmatpush1.msra.mxu0 0.0
    %140 = vmatprep.subr.mxu0 0.0
    %141 = vmatpush1.msra.mxu0 0.0
    %142 = vmatprep.subr.mxu0 0.0
    %143 = vmatpush1.msra.mxu0 0.0
    %144 = vmatprep.subr.mxu0 0.0
    %145 = vmatpush1.msra.mxu0 0.0
    %146 = vmatprep.subr.mxu0 0.0
    %147 = vmatpush1.msra.mxu0 0.0
    %148 = vmatprep.subr.mxu0 0.0
    %149 = vmatpush1.msra.mxu0 0.0
    %150 = vmatprep.mubr.f32.mxu0 0.0
    %151 = vmatmul.mubr.f32.gmra.mrb[0].mxu0 %v84
    %v152 = vpop.f32.mrb[0].mxu0
    %v153 = vadd.f32 0.0, %v152
    %v154 = vpop.f32.mrb[0].mxu0
    %155 = vdwg.mxu0
    %v156 = vadd.f32 %v81, %v153
    %v157 = vxor.u32 %v156, 2147483648
    %v158 = vmul.f32 %v157, 1.442695
    %v159 = vpow.pop %v158
    %v160 = vadd.f32 %v159, 1.0
    %v161 = vrcp.pop %v160
    %v162 = vmul.f32 1.0, %v161
    %v163 = vtanh.pop %v156
    %165 = vrot.lane.b32.xlu0 %v71, 32
    %v166 = vpop.permute.xlu0 %165
    %v168 = vmul.f32 %v162, %v166
    %170 = vrot.lane.b32.xlu0 %v163, 64
    %v171 = vpop.permute.xlu0 %170
    %v173 = vmul.f32 %v162, %v171
    %175 = vrot.lane.b32.xlu0 %v173, 32
    %v176 = vpop.permute.xlu0 %175
    %v178 = vadd.f32 %v168, %v176
    %v179 = vtanh.pop %v178
    %181 = vrot.lane.b32.xlu0 %v179, 64
    %v182 = vpop.permute.xlu0 %181
    %v184 = vmul.f32 %v162, %v182
    %v186 = vcombine.high %v184, %v184
    %v188 = vunpack.c.l.s4 1966171168
    %v189 = vunpack.c.0.s8 %v188
    %v190 = vlaneseq
    %v191 = vshrl.u32 %v190, 7
    %v192 = vsub.s32 %v189, %v191
    %v193 = vrot.slane %v184, %v192
    %v195 = vunpack.c.l.s4 1966171168
    %v196 = vunpack.c.0.s8 %v195
    %v197 = vlaneseq
    %v198 = vshrl.u32 %v197, 7
    %v199 = vsub.s32 %v196, %v198
    %v200 = vrot.slane %v186, %v199
    %v201 = vcombine.high %v193, %v193
    %v202 = vcombine.high %v200, %v200
    %v204 = vunpack.c.l.s4 1966171168
    %v205 = vunpack.c.0.s8 %v204
    %v206 = vlaneseq
    %v207 = vshrl.u32 %v206, 7
    %v208 = vsub.s32 %v205, %v207
    %v209 = vrot.slane %v193, %v208
    %v211 = vunpack.c.l.s4 1966171168
    %v212 = vunpack.c.0.s8 %v211
    %v213 = vlaneseq
    %v214 = vshrl.u32 %v213, 7
    %v215 = vsub.s32 %v212, %v214
    %v216 = vrot.slane %v200, %v215
    %v218 = vunpack.c.l.s4 1966171168
    %v219 = vunpack.c.0.s8 %v218
    %v220 = vlaneseq
    %v221 = vshrl.u32 %v220, 7
    %v222 = vsub.s32 %v219, %v221
    %v223 = vrot.slane %v201, %v222
    %v225 = vunpack.c.l.s4 1966171168
    %v226 = vunpack.c.0.s8 %v225
    %v227 = vlaneseq
    %v228 = vshrl.u32 %v227, 7
    %v229 = vsub.s32 %v226, %v228
    %v230 = vrot.slane %v202, %v229
    %v231 = vcombine.high %v209, %v209
    %v232 = vcombine.high %v216, %v216
    %v233 = vcombine.high %v223, %v223
    %v234 = vcombine.high %v230, %v230
    %v235 = vlaneseq
    %v236 = vshrl.u32 %v235, 7
    %v237 = vsub.s32 0, %v236
    %v238 = vrot.slane %v209, %v237
    %239 = vrot.lane.b32.xlu0 %v238, 32
    %v240 = vpop.permute.xlu0 %239
    %v241 = vsel %vm77, %v240, 0
    %v244 = vsel %vm77, %v37, 0
    %246 = vmatprep.subr.mxu0 0.0
    %247 = vmatpush1.xpose.msra.mxu0 %v244
    %248 = vmatprep.subr.mxu0 0.0
    %249 = vmatpush1.xpose.msra.mxu0 0.0
    %250 = vmatprep.subr.mxu0 0.0
    %251 = vmatpush1.xpose.msra.mxu0 0.0
    %252 = vmatprep.subr.mxu0 0.0
    %253 = vmatpush1.xpose.msra.mxu0 0.0
    %254 = vmatprep.subr.mxu0 0.0
    %255 = vmatpush1.xpose.msra.mxu0 0.0
    %256 = vmatprep.subr.mxu0 0.0
    %257 = vmatpush1.xpose.msra.mxu0 0.0
    %258 = vmatprep.subr.mxu0 0.0
    %259 = vmatpush1.xpose.msra.mxu0 0.0
    %260 = vmatprep.subr.mxu0 0.0
    %261 = vmatpush1.xpose.msra.mxu0 0.0
    %262 = vmatprep.subr.mxu0 0.0
    %263 = vmatpush1.xpose.msra.mxu0 0.0
    %264 = vmatprep.subr.mxu0 0.0
    %265 = vmatpush1.xpose.msra.mxu0 0.0
    %266 = vmatprep.subr.mxu0 0.0
    %267 = vmatpush1.xpose.msra.mxu0 0.0
    %268 = vmatprep.subr.mxu0 0.0
    %269 = vmatpush1.xpose.msra.mxu0 0.0
    %270 = vmatprep.subr.mxu0 0.0
    %271 = vmatpush1.xpose.msra.mxu0 0.0
    %272 = vmatprep.subr.mxu0 0.0
    %273 = vmatpush1.xpose.msra.mxu0 0.0
    %274 = vmatprep.subr.mxu0 0.0
    %275 = vmatpush1.xpose.msra.mxu0 0.0
    %276 = vmatprep.subr.mxu0 0.0
    %277 = vmatpush1.xpose.msra.mxu0 0.0
    %278 = vmatprep.subr.mxu0 0.0
    %279 = vmatpush1.xpose.msra.mxu0 0.0
    %280 = vmatprep.subr.mxu0 0.0
    %281 = vmatpush1.xpose.msra.mxu0 0.0
    %282 = vmatprep.subr.mxu0 0.0
    %283 = vmatpush1.xpose.msra.mxu0 0.0
    %284 = vmatprep.subr.mxu0 0.0
    %285 = vmatpush1.xpose.msra.mxu0 0.0
    %286 = vmatprep.subr.mxu0 0.0
    %287 = vmatpush1.xpose.msra.mxu0 0.0
    %288 = vmatprep.subr.mxu0 0.0
    %289 = vmatpush1.xpose.msra.mxu0 0.0
    %290 = vmatprep.subr.mxu0 0.0
    %291 = vmatpush1.xpose.msra.mxu0 0.0
    %292 = vmatprep.subr.mxu0 0.0
    %293 = vmatpush1.xpose.msra.mxu0 0.0
    %294 = vmatprep.subr.mxu0 0.0
    %295 = vmatpush1.xpose.msra.mxu0 0.0
    %296 = vmatprep.subr.mxu0 0.0
    %297 = vmatpush1.xpose.msra.mxu0 0.0
    %298 = vmatprep.subr.mxu0 0.0
    %299 = vmatpush1.xpose.msra.mxu0 0.0
    %300 = vmatprep.subr.mxu0 0.0
    %301 = vmatpush1.xpose.msra.mxu0 0.0
    %302 = vmatprep.subr.mxu0 0.0
    %303 = vmatpush1.xpose.msra.mxu0 0.0
    %304 = vmatprep.subr.mxu0 0.0
    %305 = vmatpush1.xpose.msra.mxu0 0.0
    %306 = vmatprep.subr.mxu0 0.0
    %307 = vmatpush1.xpose.msra.mxu0 0.0
    %308 = vmatprep.subr.mxu0 0.0
    %309 = vmatpush1.xpose.msra.mxu0 0.0
    %310 = vmatprep.mubr.f32.mxu0 0.0
    %311 = vmatmul.mubr.f32.gmra.mrb[0].mxu0 %v241
    %v312 = vpop.f32.mrb[0].mxu0
    %v313 = vadd.f32 %v45, %v312
    %v314 = vpop.f32.mrb[0].mxu0
    %315 = vdwg.mxu0
    %v316 = vlaneseq
    %v317 = vshrl.u32 %v316, 7
    %v318 = vsub.s32 0, %v317
    %v319 = vrot.slane %v223, %v318
    %320 = vrot.lane.b32.xlu0 %v319, 32
    %v321 = vpop.permute.xlu0 %320
    %v322 = vsel %vm77, %v321, 0
    %v325 = vsel %vm77, %v38, 0
    %327 = vmatprep.subr.mxu0 0.0
    %328 = vmatpush1.xpose.msra.mxu0 %v325
    %329 = vmatprep.subr.mxu0 0.0
    %330 = vmatpush1.xpose.msra.mxu0 0.0
    %331 = vmatprep.subr.mxu0 0.0
    %332 = vmatpush1.xpose.msra.mxu0 0.0
    %333 = vmatprep.subr.mxu0 0.0
    %334 = vmatpush1.xpose.msra.mxu0 0.0
    %335 = vmatprep.subr.mxu0 0.0
    %336 = vmatpush1.xpose.msra.mxu0 0.0
    %337 = vmatprep.subr.mxu0 0.0
    %338 = vmatpush1.xpose.msra.mxu0 0.0
    %339 = vmatprep.subr.mxu0 0.0
    %340 = vmatpush1.xpose.msra.mxu0 0.0
    %341 = vmatprep.subr.mxu0 0.0
    %342 = vmatpush1.xpose.msra.mxu0 0.0
    %343 = vmatprep.subr.mxu0 0.0
    %344 = vmatpush1.xpose.msra.mxu0 0.0
    %345 = vmatprep.subr.mxu0 0.0
    %346 = vmatpush1.xpose.msra.mxu0 0.0
    %347 = vmatprep.subr.mxu0 0.0
    %348 = vmatpush1.xpose.msra.mxu0 0.0
    %349 = vmatprep.subr.mxu0 0.0
    %350 = vmatpush1.xpose.msra.mxu0 0.0
    %351 = vmatprep.subr.mxu0 0.0
    %352 = vmatpush1.xpose.msra.mxu0 0.0
    %353 = vmatprep.subr.mxu0 0.0
    %354 = vmatpush1.xpose.msra.mxu0 0.0
    %355 = vmatprep.subr.mxu0 0.0
    %356 = vmatpush1.xpose.msra.mxu0 0.0
    %357 = vmatprep.subr.mxu0 0.0
    %358 = vmatpush1.xpose.msra.mxu0 0.0
    %359 = vmatprep.subr.mxu0 0.0
    %360 = vmatpush1.xpose.msra.mxu0 0.0
    %361 = vmatprep.subr.mxu0 0.0
    %362 = vmatpush1.xpose.msra.mxu0 0.0
    %363 = vmatprep.subr.mxu0 0.0
    %364 = vmatpush1.xpose.msra.mxu0 0.0
    %365 = vmatprep.subr.mxu0 0.0
    %366 = vmatpush1.xpose.msra.mxu0 0.0
    %367 = vmatprep.subr.mxu0 0.0
    %368 = vmatpush1.xpose.msra.mxu0 0.0
    %369 = vmatprep.subr.mxu0 0.0
    %370 = vmatpush1.xpose.msra.mxu0 0.0
    %371 = vmatprep.subr.mxu0 0.0
    %372 = vmatpush1.xpose.msra.mxu0 0.0
    %373 = vmatprep.subr.mxu0 0.0
    %374 = vmatpush1.xpose.msra.mxu0 0.0
    %375 = vmatprep.subr.mxu0 0.0
    %376 = vmatpush1.xpose.msra.mxu0 0.0
    %377 = vmatprep.subr.mxu0 0.0
    %378 = vmatpush1.xpose.msra.mxu0 0.0
    %379 = vmatprep.subr.mxu0 0.0
    %380 = vmatpush1.xpose.msra.mxu0 0.0
    %381 = vmatprep.subr.mxu0 0.0
    %382 = vmatpush1.xpose.msra.mxu0 0.0
    %383 = vmatprep.subr.mxu0 0.0
    %384 = vmatpush1.xpose.msra.mxu0 0.0
    %385 = vmatprep.subr.mxu0 0.0
    %386 = vmatpush1.xpose.msra.mxu0 0.0
    %387 = vmatprep.subr.mxu0 0.0
    %388 = vmatpush1.xpose.msra.mxu0 0.0
    %389 = vmatprep.subr.mxu0 0.0
    %390 = vmatpush1.xpose.msra.mxu0 0.0
    %391 = vmatprep.mubr.f32.mxu0 0.0
    %392 = vmatmul.mubr.f32.gmra.mrb[0].mxu0 %v322
    %v393 = vpop.f32.mrb[0].mxu0
    %v394 = vadd.f32 %v46, %v393
    %v395 = vpop.f32.mrb[0].mxu0
    %396 = vdwg.mxu0
    %v397 = vlaneseq
    %v398 = vshrl.u32 %v397, 7
    %v399 = vsub.s32 0, %v398
    %v400 = vrot.slane %v231, %v399
    %401 = vrot.lane.b32.xlu0 %v400, 32
    %v402 = vpop.permute.xlu0 %401
    %v403 = vsel %vm77, %v402, 0
    %v406 = vsel %vm77, %v39, 0
    %408 = vmatprep.subr.mxu0 0.0
    %409 = vmatpush1.xpose.msra.mxu0 %v406
    %410 = vmatprep.subr.mxu0 0.0
    %411 = vmatpush1.xpose.msra.mxu0 0.0
    %412 = vmatprep.subr.mxu0 0.0
    %413 = vmatpush1.xpose.msra.mxu0 0.0
    %414 = vmatprep.subr.mxu0 0.0
    %415 = vmatpush1.xpose.msra.mxu0 0.0
    %416 = vmatprep.subr.mxu0 0.0
    %417 = vmatpush1.xpose.msra.mxu0 0.0
    %418 = vmatprep.subr.mxu0 0.0
    %419 = vmatpush1.xpose.msra.mxu0 0.0
    %420 = vmatprep.subr.mxu0 0.0
    %421 = vmatpush1.xpose.msra.mxu0 0.0
    %422 = vmatprep.subr.mxu0 0.0
    %423 = vmatpush1.xpose.msra.mxu0 0.0
    %424 = vmatprep.subr.mxu0 0.0
    %425 = vmatpush1.xpose.msra.mxu0 0.0
    %426 = vmatprep.subr.mxu0 0.0
    %427 = vmatpush1.xpose.msra.mxu0 0.0
    %428 = vmatprep.subr.mxu0 0.0
    %429 = vmatpush1.xpose.msra.mxu0 0.0
    %430 = vmatprep.subr.mxu0 0.0
    %431 = vmatpush1.xpose.msra.mxu0 0.0
    %432 = vmatprep.subr.mxu0 0.0
    %433 = vmatpush1.xpose.msra.mxu0 0.0
    %434 = vmatprep.subr.mxu0 0.0
    %435 = vmatpush1.xpose.msra.mxu0 0.0
    %436 = vmatprep.subr.mxu0 0.0
    %437 = vmatpush1.xpose.msra.mxu0 0.0
    %438 = vmatprep.subr.mxu0 0.0
    %439 = vmatpush1.xpose.msra.mxu0 0.0
    %440 = vmatprep.subr.mxu0 0.0
    %441 = vmatpush1.xpose.msra.mxu0 0.0
    %442 = vmatprep.subr.mxu0 0.0
    %443 = vmatpush1.xpose.msra.mxu0 0.0
    %444 = vmatprep.subr.mxu0 0.0
    %445 = vmatpush1.xpose.msra.mxu0 0.0
    %446 = vmatprep.subr.mxu0 0.0
    %447 = vmatpush1.xpose.msra.mxu0 0.0
    %448 = vmatprep.subr.mxu0 0.0
    %449 = vmatpush1.xpose.msra.mxu0 0.0
    %450 = vmatprep.subr.mxu0 0.0
    %451 = vmatpush1.xpose.msra.mxu0 0.0
    %452 = vmatprep.subr.mxu0 0.0
    %453 = vmatpush1.xpose.msra.mxu0 0.0
    %454 = vmatprep.subr.mxu0 0.0
    %455 = vmatpush1.xpose.msra.mxu0 0.0
    %456 = vmatprep.subr.mxu0 0.0
    %457 = vmatpush1.xpose.msra.mxu0 0.0
    %458 = vmatprep.subr.mxu0 0.0
    %459 = vmatpush1.xpose.msra.mxu0 0.0
    %460 = vmatprep.subr.mxu0 0.0
    %461 = vmatpush1.xpose.msra.mxu0 0.0
    %462 = vmatprep.subr.mxu0 0.0
    %463 = vmatpush1.xpose.msra.mxu0 0.0
    %464 = vmatprep.subr.mxu0 0.0
    %465 = vmatpush1.xpose.msra.mxu0 0.0
    %466 = vmatprep.subr.mxu0 0.0
    %467 = vmatpush1.xpose.msra.mxu0 0.0
    %468 = vmatprep.subr.mxu0 0.0
    %469 = vmatpush1.xpose.msra.mxu0 0.0
    %470 = vmatprep.subr.mxu0 0.0
    %471 = vmatpush1.xpose.msra.mxu0 0.0
    %472 = vmatprep.mubr.f32.mxu0 0.0
    %473 = vmatmul.mubr.f32.gmra.mrb[0].mxu0 %v403
    %v474 = vpop.f32.mrb[0].mxu0
    %v475 = vadd.f32 %v47, %v474
    %v476 = vpop.f32.mrb[0].mxu0
    %477 = vdwg.mxu0
    %v478 = vlaneseq
    %v479 = vshrl.u32 %v478, 7
    %v480 = vsub.s32 0, %v479
    %v481 = vrot.slane %v233, %v480
    %482 = vrot.lane.b32.xlu0 %v481, 32
    %v483 = vpop.permute.xlu0 %482
    %v484 = vsel %vm77, %v483, 0
    %v487 = vsel %vm77, %v40, 0
    %489 = vmatprep.subr.mxu0 0.0
    %490 = vmatpush1.xpose.msra.mxu0 %v487
    %491 = vmatprep.subr.mxu0 0.0
    %492 = vmatpush1.xpose.msra.mxu0 0.0
    %493 = vmatprep.subr.mxu0 0.0
    %494 = vmatpush1.xpose.msra.mxu0 0.0
    %495 = vmatprep.subr.mxu0 0.0
    %496 = vmatpush1.xpose.msra.mxu0 0.0
    %497 = vmatprep.subr.mxu0 0.0
    %498 = vmatpush1.xpose.msra.mxu0 0.0
    %499 = vmatprep.subr.mxu0 0.0
    %500 = vmatpush1.xpose.msra.mxu0 0.0
    %501 = vmatprep.subr.mxu0 0.0
    %502 = vmatpush1.xpose.msra.mxu0 0.0
    %503 = vmatprep.subr.mxu0 0.0
    %504 = vmatpush1.xpose.msra.mxu0 0.0
    %505 = vmatprep.subr.mxu0 0.0
    %506 = vmatpush1.xpose.msra.mxu0 0.0
    %507 = vmatprep.subr.mxu0 0.0
    %508 = vmatpush1.xpose.msra.mxu0 0.0
    %509 = vmatprep.subr.mxu0 0.0
    %510 = vmatpush1.xpose.msra.mxu0 0.0
    %511 = vmatprep.subr.mxu0 0.0
    %512 = vmatpush1.xpose.msra.mxu0 0.0
    %513 = vmatprep.subr.mxu0 0.0
    %514 = vmatpush1.xpose.msra.mxu0 0.0
    %515 = vmatprep.subr.mxu0 0.0
    %516 = vmatpush1.xpose.msra.mxu0 0.0
    %517 = vmatprep.subr.mxu0 0.0
    %518 = vmatpush1.xpose.msra.mxu0 0.0
    %519 = vmatprep.subr.mxu0 0.0
    %520 = vmatpush1.xpose.msra.mxu0 0.0
    %521 = vmatprep.subr.mxu0 0.0
    %522 = vmatpush1.xpose.msra.mxu0 0.0
    %523 = vmatprep.subr.mxu0 0.0
    %524 = vmatpush1.xpose.msra.mxu0 0.0
    %525 = vmatprep.subr.mxu0 0.0
    %526 = vmatpush1.xpose.msra.mxu0 0.0
    %527 = vmatprep.subr.mxu0 0.0
    %528 = vmatpush1.xpose.msra.mxu0 0.0
    %529 = vmatprep.subr.mxu0 0.0
    %530 = vmatpush1.xpose.msra.mxu0 0.0
    %531 = vmatprep.subr.mxu0 0.0
    %532 = vmatpush1.xpose.msra.mxu0 0.0
    %533 = vmatprep.subr.mxu0 0.0
    %534 = vmatpush1.xpose.msra.mxu0 0.0
    %535 = vmatprep.subr.mxu0 0.0
    %536 = vmatpush1.xpose.msra.mxu0 0.0
    %537 = vmatprep.subr.mxu0 0.0
    %538 = vmatpush1.xpose.msra.mxu0 0.0
    %539 = vmatprep.subr.mxu0 0.0
    %540 = vmatpush1.xpose.msra.mxu0 0.0
    %541 = vmatprep.subr.mxu0 0.0
    %542 = vmatpush1.xpose.msra.mxu0 0.0
    %543 = vmatprep.subr.mxu0 0.0
    %544 = vmatpush1.xpose.msra.mxu0 0.0
    %545 = vmatprep.subr.mxu0 0.0
    %546 = vmatpush1.xpose.msra.mxu0 0.0
    %547 = vmatprep.subr.mxu0 0.0
    %548 = vmatpush1.xpose.msra.mxu0 0.0
    %549 = vmatprep.subr.mxu0 0.0
    %550 = vmatpush1.xpose.msra.mxu0 0.0
    %551 = vmatprep.subr.mxu0 0.0
    %552 = vmatpush1.xpose.msra.mxu0 0.0
    %553 = vmatprep.mubr.f32.mxu0 0.0
    %554 = vmatmul.mubr.f32.gmra.mrb[0].mxu0 %v484
    %v555 = vpop.f32.mrb[0].mxu0
    %v556 = vadd.f32 %v48, %v555
    %v557 = vpop.f32.mrb[0].mxu0
    %558 = vdwg.mxu0
    %v559 = vlaneseq
    %v560 = vshrl.u32 %v559, 7
    %v561 = vsub.s32 0, %v560
    %v562 = vrot.slane %v216, %v561
    %563 = vrot.lane.b32.xlu0 %v562, 32
    %v564 = vpop.permute.xlu0 %563
    %v565 = vsel %vm77, %v564, 0
    %v568 = vsel %vm77, %v41, 0
    %570 = vmatprep.subr.mxu0 0.0
    %571 = vmatpush1.xpose.msra.mxu0 %v568
    %572 = vmatprep.subr.mxu0 0.0
    %573 = vmatpush1.xpose.msra.mxu0 0.0
    %574 = vmatprep.subr.mxu0 0.0
    %575 = vmatpush1.xpose.msra.mxu0 0.0
    %576 = vmatprep.subr.mxu0 0.0
    %577 = vmatpush1.xpose.msra.mxu0 0.0
    %578 = vmatprep.subr.mxu0 0.0
    %579 = vmatpush1.xpose.msra.mxu0 0.0
    %580 = vmatprep.subr.mxu0 0.0
    %581 = vmatpush1.xpose.msra.mxu0 0.0
    %582 = vmatprep.subr.mxu0 0.0
    %583 = vmatpush1.xpose.msra.mxu0 0.0
    %584 = vmatprep.subr.mxu0 0.0
    %585 = vmatpush1.xpose.msra.mxu0 0.0
    %586 = vmatprep.subr.mxu0 0.0
    %587 = vmatpush1.xpose.msra.mxu0 0.0
    %588 = vmatprep.subr.mxu0 0.0
    %589 = vmatpush1.xpose.msra.mxu0 0.0
    %590 = vmatprep.subr.mxu0 0.0
    %591 = vmatpush1.xpose.msra.mxu0 0.0
    %592 = vmatprep.subr.mxu0 0.0
    %593 = vmatpush1.xpose.msra.mxu0 0.0
    %594 = vmatprep.subr.mxu0 0.0
    %595 = vmatpush1.xpose.msra.mxu0 0.0
    %596 = vmatprep.subr.mxu0 0.0
    %597 = vmatpush1.xpose.msra.mxu0 0.0
    %598 = vmatprep.subr.mxu0 0.0
    %599 = vmatpush1.xpose.msra.mxu0 0.0
    %600 = vmatprep.subr.mxu0 0.0
    %601 = vmatpush1.xpose.msra.mxu0 0.0
    %602 = vmatprep.subr.mxu0 0.0
    %603 = vmatpush1.xpose.msra.mxu0 0.0
    %604 = vmatprep.subr.mxu0 0.0
    %605 = vmatpush1.xpose.msra.mxu0 0.0
    %606 = vmatprep.subr.mxu0 0.0
    %607 = vmatpush1.xpose.msra.mxu0 0.0
    %608 = vmatprep.subr.mxu0 0.0
    %609 = vmatpush1.xpose.msra.mxu0 0.0
    %610 = vmatprep.subr.mxu0 0.0
    %611 = vmatpush1.xpose.msra.mxu0 0.0
    %612 = vmatprep.subr.mxu0 0.0
    %613 = vmatpush1.xpose.msra.mxu0 0.0
    %614 = vmatprep.subr.mxu0 0.0
    %615 = vmatpush1.xpose.msra.mxu0 0.0
    %616 = vmatprep.subr.mxu0 0.0
    %617 = vmatpush1.xpose.msra.mxu0 0.0
    %618 = vmatprep.subr.mxu0 0.0
    %619 = vmatpush1.xpose.msra.mxu0 0.0
    %620 = vmatprep.subr.mxu0 0.0
    %621 = vmatpush1.xpose.msra.mxu0 0.0
    %622 = vmatprep.subr.mxu0 0.0
    %623 = vmatpush1.xpose.msra.mxu0 0.0
    %624 = vmatprep.subr.mxu0 0.0
    %625 = vmatpush1.xpose.msra.mxu0 0.0
    %626 = vmatprep.subr.mxu0 0.0
    %627 = vmatpush1.xpose.msra.mxu0 0.0
    %628 = vmatprep.subr.mxu0 0.0
    %629 = vmatpush1.xpose.msra.mxu0 0.0
    %630 = vmatprep.subr.mxu0 0.0
    %631 = vmatpush1.xpose.msra.mxu0 0.0
    %632 = vmatprep.subr.mxu0 0.0
    %633 = vmatpush1.xpose.msra.mxu0 0.0
    %634 = vmatprep.mubr.f32.mxu0 0.0
    %635 = vmatmul.mubr.f32.gmra.mrb[0].mxu0 %v565
    %v636 = vpop.f32.mrb[0].mxu0
    %v637 = vadd.f32 %v49, %v636
    %v638 = vpop.f32.mrb[0].mxu0
    %639 = vdwg.mxu0
    %v640 = vlaneseq
    %v641 = vshrl.u32 %v640, 7
    %v642 = vsub.s32 0, %v641
    %v643 = vrot.slane %v230, %v642
    %644 = vrot.lane.b32.xlu0 %v643, 32
    %v645 = vpop.permute.xlu0 %644
    %v646 = vsel %vm77, %v645, 0
    %v649 = vsel %vm77, %v42, 0
    %651 = vmatprep.subr.mxu0 0.0
    %652 = vmatpush1.xpose.msra.mxu0 %v649
    %653 = vmatprep.subr.mxu0 0.0
    %654 = vmatpush1.xpose.msra.mxu0 0.0
    %655 = vmatprep.subr.mxu0 0.0
    %656 = vmatpush1.xpose.msra.mxu0 0.0
    %657 = vmatprep.subr.mxu0 0.0
    %658 = vmatpush1.xpose.msra.mxu0 0.0
    %659 = vmatprep.subr.mxu0 0.0
    %660 = vmatpush1.xpose.msra.mxu0 0.0
    %661 = vmatprep.subr.mxu0 0.0
    %662 = vmatpush1.xpose.msra.mxu0 0.0
    %663 = vmatprep.subr.mxu0 0.0
    %664 = vmatpush1.xpose.msra.mxu0 0.0
    %665 = vmatprep.subr.mxu0 0.0
    %666 = vmatpush1.xpose.msra.mxu0 0.0
    %667 = vmatprep.subr.mxu0 0.0
    %668 = vmatpush1.xpose.msra.mxu0 0.0
    %669 = vmatprep.subr.mxu0 0.0
    %670 = vmatpush1.xpose.msra.mxu0 0.0
    %671 = vmatprep.subr.mxu0 0.0
    %672 = vmatpush1.xpose.msra.mxu0 0.0
    %673 = vmatprep.subr.mxu0 0.0
    %674 = vmatpush1.xpose.msra.mxu0 0.0
    %675 = vmatprep.subr.mxu0 0.0
    %676 = vmatpush1.xpose.msra.mxu0 0.0
    %677 = vmatprep.subr.mxu0 0.0
    %678 = vmatpush1.xpose.msra.mxu0 0.0
    %679 = vmatprep.subr.mxu0 0.0
    %680 = vmatpush1.xpose.msra.mxu0 0.0
    %681 = vmatprep.subr.mxu0 0.0
    %682 = vmatpush1.xpose.msra.mxu0 0.0
    %683 = vmatprep.subr.mxu0 0.0
    %684 = vmatpush1.xpose.msra.mxu0 0.0
    %685 = vmatprep.subr.mxu0 0.0
    %686 = vmatpush1.xpose.msra.mxu0 0.0
    %687 = vmatprep.subr.mxu0 0.0
    %688 = vmatpush1.xpose.msra.mxu0 0.0
    %689 = vmatprep.subr.mxu0 0.0
    %690 = vmatpush1.xpose.msra.mxu0 0.0
    %691 = vmatprep.subr.mxu0 0.0
    %692 = vmatpush1.xpose.msra.mxu0 0.0
    %693 = vmatprep.subr.mxu0 0.0
    %694 = vmatpush1.xpose.msra.mxu0 0.0
    %695 = vmatprep.subr.mxu0 0.0
    %696 = vmatpush1.xpose.msra.mxu0 0.0
    %697 = vmatprep.subr.mxu0 0.0
    %698 = vmatpush1.xpose.msra.mxu0 0.0
    %699 = vmatprep.subr.mxu0 0.0
    %700 = vmatpush1.xpose.msra.mxu0 0.0
    %701 = vmatprep.subr.mxu0 0.0
    %702 = vmatpush1.xpose.msra.mxu0 0.0
    %703 = vmatprep.subr.mxu0 0.0
    %704 = vmatpush1.xpose.msra.mxu0 0.0
    %705 = vmatprep.subr.mxu0 0.0
    %706 = vmatpush1.xpose.msra.mxu0 0.0
    %707 = vmatprep.subr.mxu0 0.0
    %708 = vmatpush1.xpose.msra.mxu0 0.0
    %709 = vmatprep.subr.mxu0 0.0
    %710 = vmatpush1.xpose.msra.mxu0 0.0
    %711 = vmatprep.subr.mxu0 0.0
    %712 = vmatpush1.xpose.msra.mxu0 0.0
    %713 = vmatprep.subr.mxu0 0.0
    %714 = vmatpush1.xpose.msra.mxu0 0.0
    %715 = vmatprep.mubr.f32.mxu0 0.0
    %716 = vmatmul.mubr.f32.gmra.mrb[0].mxu0 %v646
    %v717 = vpop.f32.mrb[0].mxu0
    %v718 = vadd.f32 %v50, %v717
    %v719 = vpop.f32.mrb[0].mxu0
    %720 = vdwg.mxu0
    %v721 = vlaneseq
    %v722 = vshrl.u32 %v721, 7
    %v723 = vsub.s32 0, %v722
    %v724 = vrot.slane %v232, %v723
    %725 = vrot.lane.b32.xlu0 %v724, 32
    %v726 = vpop.permute.xlu0 %725
    %v727 = vsel %vm77, %v726, 0
    %v730 = vsel %vm77, %v43, 0
    %732 = vmatprep.subr.mxu0 0.0
    %733 = vmatpush1.xpose.msra.mxu0 %v730
    %734 = vmatprep.subr.mxu0 0.0
    %735 = vmatpush1.xpose.msra.mxu0 0.0
    %736 = vmatprep.subr.mxu0 0.0
    %737 = vmatpush1.xpose.msra.mxu0 0.0
    %738 = vmatprep.subr.mxu0 0.0
    %739 = vmatpush1.xpose.msra.mxu0 0.0
    %740 = vmatprep.subr.mxu0 0.0
    %741 = vmatpush1.xpose.msra.mxu0 0.0
    %742 = vmatprep.subr.mxu0 0.0
    %743 = vmatpush1.xpose.msra.mxu0 0.0
    %744 = vmatprep.subr.mxu0 0.0
    %745 = vmatpush1.xpose.msra.mxu0 0.0
    %746 = vmatprep.subr.mxu0 0.0
    %747 = vmatpush1.xpose.msra.mxu0 0.0
    %748 = vmatprep.subr.mxu0 0.0
    %749 = vmatpush1.xpose.msra.mxu0 0.0
    %750 = vmatprep.subr.mxu0 0.0
    %751 = vmatpush1.xpose.msra.mxu0 0.0
    %752 = vmatprep.subr.mxu0 0.0
    %753 = vmatpush1.xpose.msra.mxu0 0.0
    %754 = vmatprep.subr.mxu0 0.0
    %755 = vmatpush1.xpose.msra.mxu0 0.0
    %756 = vmatprep.subr.mxu0 0.0
    %757 = vmatpush1.xpose.msra.mxu0 0.0
    %758 = vmatprep.subr.mxu0 0.0
    %759 = vmatpush1.xpose.msra.mxu0 0.0
    %760 = vmatprep.subr.mxu0 0.0
    %761 = vmatpush1.xpose.msra.mxu0 0.0
    %762 = vmatprep.subr.mxu0 0.0
    %763 = vmatpush1.xpose.msra.mxu0 0.0
    %764 = vmatprep.subr.mxu0 0.0
    %765 = vmatpush1.xpose.msra.mxu0 0.0
    %766 = vmatprep.subr.mxu0 0.0
    %767 = vmatpush1.xpose.msra.mxu0 0.0
    %768 = vmatprep.subr.mxu0 0.0
    %769 = vmatpush1.xpose.msra.mxu0 0.0
    %770 = vmatprep.subr.mxu0 0.0
    %771 = vmatpush1.xpose.msra.mxu0 0.0
    %772 = vmatprep.subr.mxu0 0.0
    %773 = vmatpush1.xpose.msra.mxu0 0.0
    %774 = vmatprep.subr.mxu0 0.0
    %775 = vmatpush1.xpose.msra.mxu0 0.0
    %776 = vmatprep.subr.mxu0 0.0
    %777 = vmatpush1.xpose.msra.mxu0 0.0
    %778 = vmatprep.subr.mxu0 0.0
    %779 = vmatpush1.xpose.msra.mxu0 0.0
    %780 = vmatprep.subr.mxu0 0.0
    %781 = vmatpush1.xpose.msra.mxu0 0.0
    %782 = vmatprep.subr.mxu0 0.0
    %783 = vmatpush1.xpose.msra.mxu0 0.0
    %784 = vmatprep.subr.mxu0 0.0
    %785 = vmatpush1.xpose.msra.mxu0 0.0
    %786 = vmatprep.subr.mxu0 0.0
    %787 = vmatpush1.xpose.msra.mxu0 0.0
    %788 = vmatprep.subr.mxu0 0.0
    %789 = vmatpush1.xpose.msra.mxu0 0.0
    %790 = vmatprep.subr.mxu0 0.0
    %791 = vmatpush1.xpose.msra.mxu0 0.0
    %792 = vmatprep.subr.mxu0 0.0
    %793 = vmatpush1.xpose.msra.mxu0 0.0
    %794 = vmatprep.subr.mxu0 0.0
    %795 = vmatpush1.xpose.msra.mxu0 0.0
    %796 = vmatprep.mubr.f32.mxu0 0.0
    %797 = vmatmul.mubr.f32.gmra.mrb[0].mxu0 %v727
    %v798 = vpop.f32.mrb[0].mxu0
    %v799 = vadd.f32 %v51, %v798
    %v800 = vpop.f32.mrb[0].mxu0
    %801 = vdwg.mxu0
    %v802 = vlaneseq
    %v803 = vshrl.u32 %v802, 7
    %v804 = vsub.s32 0, %v803
    %v805 = vrot.slane %v234, %v804
    %806 = vrot.lane.b32.xlu0 %v805, 32
    %v807 = vpop.permute.xlu0 %806
    %v808 = vsel %vm77, %v807, 0
    %v811 = vsel %vm77, %v44, 0
    %813 = vmatprep.subr.mxu0 0.0
    %814 = vmatpush1.xpose.msra.mxu0 %v811
    %815 = vmatprep.subr.mxu0 0.0
    %816 = vmatpush1.xpose.msra.mxu0 0.0
    %817 = vmatprep.subr.mxu0 0.0
    %818 = vmatpush1.xpose.msra.mxu0 0.0
    %819 = vmatprep.subr.mxu0 0.0
    %820 = vmatpush1.xpose.msra.mxu0 0.0
    %821 = vmatprep.subr.mxu0 0.0
    %822 = vmatpush1.xpose.msra.mxu0 0.0
    %823 = vmatprep.subr.mxu0 0.0
    %824 = vmatpush1.xpose.msra.mxu0 0.0
    %825 = vmatprep.subr.mxu0 0.0
    %826 = vmatpush1.xpose.msra.mxu0 0.0
    %827 = vmatprep.subr.mxu0 0.0
    %828 = vmatpush1.xpose.msra.mxu0 0.0
    %829 = vmatprep.subr.mxu0 0.0
    %830 = vmatpush1.xpose.msra.mxu0 0.0
    %831 = vmatprep.subr.mxu0 0.0
    %832 = vmatpush1.xpose.msra.mxu0 0.0
    %833 = vmatprep.subr.mxu0 0.0
    %834 = vmatpush1.xpose.msra.mxu0 0.0
    %835 = vmatprep.subr.mxu0 0.0
    %836 = vmatpush1.xpose.msra.mxu0 0.0
    %837 = vmatprep.subr.mxu0 0.0
    %838 = vmatpush1.xpose.msra.mxu0 0.0
    %839 = vmatprep.subr.mxu0 0.0
    %840 = vmatpush1.xpose.msra.mxu0 0.0
    %841 = vmatprep.subr.mxu0 0.0
    %842 = vmatpush1.xpose.msra.mxu0 0.0
    %843 = vmatprep.subr.mxu0 0.0
    %844 = vmatpush1.xpose.msra.mxu0 0.0
    %845 = vmatprep.subr.mxu0 0.0
    %846 = vmatpush1.xpose.msra.mxu0 0.0
    %847 = vmatprep.subr.mxu0 0.0
    %848 = vmatpush1.xpose.msra.mxu0 0.0
    %849 = vmatprep.subr.mxu0 0.0
    %850 = vmatpush1.xpose.msra.mxu0 0.0
    %851 = vmatprep.subr.mxu0 0.0
    %852 = vmatpush1.xpose.msra.mxu0 0.0
    %853 = vmatprep.subr.mxu0 0.0
    %854 = vmatpush1.xpose.msra.mxu0 0.0
    %855 = vmatprep.subr.mxu0 0.0
    %856 = vmatpush1.xpose.msra.mxu0 0.0
    %857 = vmatprep.subr.mxu0 0.0
    %858 = vmatpush1.xpose.msra.mxu0 0.0
    %859 = vmatprep.subr.mxu0 0.0
    %860 = vmatpush1.xpose.msra.mxu0 0.0
    %861 = vmatprep.subr.mxu0 0.0
    %862 = vmatpush1.xpose.msra.mxu0 0.0
    %863 = vmatprep.subr.mxu0 0.0
    %864 = vmatpush1.xpose.msra.mxu0 0.0
    %865 = vmatprep.subr.mxu0 0.0
    %866 = vmatpush1.xpose.msra.mxu0 0.0
    %867 = vmatprep.subr.mxu0 0.0
    %868 = vmatpush1.xpose.msra.mxu0 0.0
    %869 = vmatprep.subr.mxu0 0.0
    %870 = vmatpush1.xpose.msra.mxu0 0.0
    %871 = vmatprep.subr.mxu0 0.0
    %872 = vmatpush1.xpose.msra.mxu0 0.0
    %873 = vmatprep.subr.mxu0 0.0
    %874 = vmatpush1.xpose.msra.mxu0 0.0
    %875 = vmatprep.subr.mxu0 0.0
    %876 = vmatpush1.xpose.msra.mxu0 0.0
    %877 = vmatprep.mubr.f32.mxu0 0.0
    %878 = vmatmul.mubr.f32.gmra.mrb[0].mxu0 %v808
    %v879 = vpop.f32.mrb[0].mxu0
    %v880 = vadd.f32 %v52, %v879
    %v881 = vpop.f32.mrb[0].mxu0
    %882 = vdwg.mxu0
    %vm883 = vcmask 57344
    %v884 = vsel %vm883, %v313, -inf
    %885 = vmax.xlane.f32.xlu0 %v884
    %v886 = vpop.xlane.xlu0 %885
    %v887 = vsel %vm883, %v394, -inf
    %888 = vmax.xlane.f32.xlu0 %v887
    %v889 = vpop.xlane.xlu0 %888
    %v890 = vsel %vm883, %v475, -inf
    %891 = vmax.xlane.f32.xlu0 %v890
    %v892 = vpop.xlane.xlu0 %891
    %v893 = vsel %vm883, %v556, -inf
    %894 = vmax.xlane.f32.xlu0 %v893
    %v895 = vpop.xlane.xlu0 %894
    %v896 = vsel %vm883, %v637, -inf
    %897 = vmax.xlane.f32.xlu0 %v896
    %v898 = vpop.xlane.xlu0 %897
    %v899 = vsel %vm883, %v718, -inf
    %900 = vmax.xlane.f32.xlu0 %v899
    %v901 = vpop.xlane.xlu0 %900
    %v902 = vsel %vm883, %v799, -inf
    %903 = vmax.xlane.f32.xlu0 %v902
    %v904 = vpop.xlane.xlu0 %903
    %v905 = vsel %vm883, %v880, -inf
    %906 = vmax.xlane.f32.xlu0 %v905
    %v907 = vpop.xlane.xlu0 %906
    %v908 = vsub.f32 %v313, %v886
    %v909 = vsub.f32 %v394, %v889
    %v910 = vsub.f32 %v475, %v892
    %v911 = vsub.f32 %v556, %v895
    %v912 = vsub.f32 %v637, %v898
    %v913 = vsub.f32 %v718, %v901
    %v914 = vsub.f32 %v799, %v904
    %v915 = vsub.f32 %v880, %v907
    %v916 = vmul.f32 %v908, 1.442695
    %v917 = vpow.pop %v916
    %v918 = vmul.f32 %v909, 1.442695
    %v919 = vpow.pop %v918
    %v920 = vmul.f32 %v910, 1.442695
    %v921 = vpow.pop %v920
    %v922 = vmul.f32 %v911, 1.442695
    %v923 = vpow.pop %v922
    %v924 = vmul.f32 %v912, 1.442695
    %v925 = vpow.pop %v924
    %v926 = vmul.f32 %v913, 1.442695
    %v927 = vpow.pop %v926
    %v928 = vmul.f32 %v914, 1.442695
    %v929 = vpow.pop %v928
    %v930 = vmul.f32 %v915, 1.442695
    %v931 = vpow.pop %v930
    %v932 = vsel %vm883, %v917, 0.0
    %933 = vadd.xlane.f32.xlu0 %v932
    %v934 = vpop.xlane.xlu0 %933
    %v935 = vsel %vm883, %v919, 0.0
    %936 = vadd.xlane.f32.xlu0 %v935
    %v937 = vpop.xlane.xlu0 %936
    %v938 = vsel %vm883, %v921, 0.0
    %939 = vadd.xlane.f32.xlu0 %v938
    %v940 = vpop.xlane.xlu0 %939
    %v941 = vsel %vm883, %v923, 0.0
    %942 = vadd.xlane.f32.xlu0 %v941
    %v943 = vpop.xlane.xlu0 %942
    %v944 = vsel %vm883, %v925, 0.0
    %945 = vadd.xlane.f32.xlu0 %v944
    %v946 = vpop.xlane.xlu0 %945
    %v947 = vsel %vm883, %v927, 0.0
    %948 = vadd.xlane.f32.xlu0 %v947
    %v949 = vpop.xlane.xlu0 %948
    %v950 = vsel %vm883, %v929, 0.0
    %951 = vadd.xlane.f32.xlu0 %v950
    %v952 = vpop.xlane.xlu0 %951
    %v953 = vsel %vm883, %v931, 0.0
    %954 = vadd.xlane.f32.xlu0 %v953
    %v955 = vpop.xlane.xlu0 %954
    %v956 = vrcp.pop %v934
    %v957 = vrcp.pop %v937
    %v958 = vrcp.pop %v940
    %v959 = vrcp.pop %v943
    %v960 = vrcp.pop %v946
    %v961 = vrcp.pop %v949
    %v962 = vrcp.pop %v952
    %v963 = vrcp.pop %v955
    %v964 = vmul.f32 %v917, %v956
    %v965 = vmul.f32 %v919, %v957
    %v966 = vmul.f32 %v921, %v958
    %v967 = vmul.f32 %v923, %v959
    %v968 = vmul.f32 %v925, %v960
    %v969 = vmul.f32 %v927, %v961
    %v970 = vmul.f32 %v929, %v962
    %v971 = vmul.f32 %v931, %v963
    %vm972 = vcmask 64512
    %v974 = vsel %vm972, %v964, 0
    %976 = vmatprep.subr.mxu0 0.0
    %977 = vmatpush1.msra.mxu0 %v37
    %978 = vmatprep.subr.mxu0 0.0
    %979 = vmatpush1.msra.mxu0 0.0
    %980 = vmatprep.subr.mxu0 0.0
    %981 = vmatpush1.msra.mxu0 0.0
    %982 = vmatprep.subr.mxu0 0.0
    %983 = vmatpush1.msra.mxu0 0.0
    %984 = vmatprep.subr.mxu0 0.0
    %985 = vmatpush1.msra.mxu0 0.0
    %986 = vmatprep.subr.mxu0 0.0
    %987 = vmatpush1.msra.mxu0 0.0
    %988 = vmatprep.subr.mxu0 0.0
    %989 = vmatpush1.msra.mxu0 0.0
    %990 = vmatprep.subr.mxu0 0.0
    %991 = vmatpush1.msra.mxu0 0.0
    %992 = vmatprep.subr.mxu0 0.0
    %993 = vmatpush1.msra.mxu0 0.0
    %994 = vmatprep.subr.mxu0 0.0
    %995 = vmatpush1.msra.mxu0 0.0
    %996 = vmatprep.subr.mxu0 0.0
    %997 = vmatpush1.msra.mxu0 0.0
    %998 = vmatprep.subr.mxu0 0.0
    %999 = vmatpush1.msra.mxu0 0.0
    %1000 = vmatprep.subr.mxu0 0.0
    %1001 = vmatpush1.msra.mxu0 0.0
    %1002 = vmatprep.subr.mxu0 0.0
    %1003 = vmatpush1.msra.mxu0 0.0
    %1004 = vmatprep.subr.mxu0 0.0
    %1005 = vmatpush1.msra.mxu0 0.0
    %1006 = vmatprep.subr.mxu0 0.0
    %1007 = vmatpush1.msra.mxu0 0.0
    %1008 = vmatprep.subr.mxu0 0.0
    %1009 = vmatpush1.msra.mxu0 0.0
    %1010 = vmatprep.subr.mxu0 0.0
    %1011 = vmatpush1.msra.mxu0 0.0
    %1012 = vmatprep.subr.mxu0 0.0
    %1013 = vmatpush1.msra.mxu0 0.0
    %1014 = vmatprep.subr.mxu0 0.0
    %1015 = vmatpush1.msra.mxu0 0.0
    %1016 = vmatprep.subr.mxu0 0.0
    %1017 = vmatpush1.msra.mxu0 0.0
    %1018 = vmatprep.subr.mxu0 0.0
    %1019 = vmatpush1.msra.mxu0 0.0
    %1020 = vmatprep.subr.mxu0 0.0
    %1021 = vmatpush1.msra.mxu0 0.0
    %1022 = vmatprep.subr.mxu0 0.0
    %1023 = vmatpush1.msra.mxu0 0.0
    %1024 = vmatprep.subr.mxu0 0.0
    %1025 = vmatpush1.msra.mxu0 0.0
    %1026 = vmatprep.subr.mxu0 0.0
    %1027 = vmatpush1.msra.mxu0 0.0
    %1028 = vmatprep.subr.mxu0 0.0
    %1029 = vmatpush1.msra.mxu0 0.0
    %1030 = vmatprep.subr.mxu0 0.0
    %1031 = vmatpush1.msra.mxu0 0.0
    %1032 = vmatprep.subr.mxu0 0.0
    %1033 = vmatpush1.msra.mxu0 0.0
    %1034 = vmatprep.subr.mxu0 0.0
    %1035 = vmatpush1.msra.mxu0 0.0
    %1036 = vmatprep.subr.mxu0 0.0
    %1037 = vmatpush1.msra.mxu0 0.0
    %1038 = vmatprep.subr.mxu0 0.0
    %1039 = vmatpush1.msra.mxu0 0.0
    %1040 = vmatprep.mubr.f32.mxu0 0.0
    %1041 = vmatmul.mubr.f32.gmra.mrb[0].mxu0 %v974
    %v1042 = vpop.f32.mrb[0].mxu0
    %v1043 = vadd.f32 0.0, %v1042
    %v1044 = vpop.f32.mrb[0].mxu0
    %1045 = vdwg.mxu0
    %v1047 = vsel %vm972, %v965, 0
    %1049 = vmatprep.subr.mxu0 0.0
    %1050 = vmatpush1.msra.mxu0 %v38
    %1051 = vmatprep.subr.mxu0 0.0
    %1052 = vmatpush1.msra.mxu0 0.0
    %1053 = vmatprep.subr.mxu0 0.0
    %1054 = vmatpush1.msra.mxu0 0.0
    %1055 = vmatprep.subr.mxu0 0.0
    %1056 = vmatpush1.msra.mxu0 0.0
    %1057 = vmatprep.subr.mxu0 0.0
    %1058 = vmatpush1.msra.mxu0 0.0
    %1059 = vmatprep.subr.mxu0 0.0
    %1060 = vmatpush1.msra.mxu0 0.0
    %1061 = vmatprep.subr.mxu0 0.0
    %1062 = vmatpush1.msra.mxu0 0.0
    %1063 = vmatprep.subr.mxu0 0.0
    %1064 = vmatpush1.msra.mxu0 0.0
    %1065 = vmatprep.subr.mxu0 0.0
    %1066 = vmatpush1.msra.mxu0 0.0
    %1067 = vmatprep.subr.mxu0 0.0
    %1068 = vmatpush1.msra.mxu0 0.0
    %1069 = vmatprep.subr.mxu0 0.0
    %1070 = vmatpush1.msra.mxu0 0.0
    %1071 = vmatprep.subr.mxu0 0.0
    %1072 = vmatpush1.msra.mxu0 0.0
    %1073 = vmatprep.subr.mxu0 0.0
    %1074 = vmatpush1.msra.mxu0 0.0
    %1075 = vmatprep.subr.mxu0 0.0
    %1076 = vmatpush1.msra.mxu0 0.0
    %1077 = vmatprep.subr.mxu0 0.0
    %1078 = vmatpush1.msra.mxu0 0.0
    %1079 = vmatprep.subr.mxu0 0.0
    %1080 = vmatpush1.msra.mxu0 0.0
    %1081 = vmatprep.subr.mxu0 0.0
    %1082 = vmatpush1.msra.mxu0 0.0
    %1083 = vmatprep.subr.mxu0 0.0
    %1084 = vmatpush1.msra.mxu0 0.0
    %1085 = vmatprep.subr.mxu0 0.0
    %1086 = vmatpush1.msra.mxu0 0.0
    %1087 = vmatprep.subr.mxu0 0.0
    %1088 = vmatpush1.msra.mxu0 0.0
    %1089 = vmatprep.subr.mxu0 0.0
    %1090 = vmatpush1.msra.mxu0 0.0
    %1091 = vmatprep.subr.mxu0 0.0
    %1092 = vmatpush1.msra.mxu0 0.0
    %1093 = vmatprep.subr.mxu0 0.0
    %1094 = vmatpush1.msra.mxu0 0.0
    %1095 = vmatprep.subr.mxu0 0.0
    %1096 = vmatpush1.msra.mxu0 0.0
    %1097 = vmatprep.subr.mxu0 0.0
    %1098 = vmatpush1.msra.mxu0 0.0
    %1099 = vmatprep.subr.mxu0 0.0
    %1100 = vmatpush1.msra.mxu0 0.0
    %1101 = vmatprep.subr.mxu0 0.0
    %1102 = vmatpush1.msra.mxu0 0.0
    %1103 = vmatprep.subr.mxu0 0.0
    %1104 = vmatpush1.msra.mxu0 0.0
    %1105 = vmatprep.subr.mxu0 0.0
    %1106 = vmatpush1.msra.mxu0 0.0
    %1107 = vmatprep.subr.mxu0 0.0
    %1108 = vmatpush1.msra.mxu0 0.0
    %1109 = vmatprep.subr.mxu0 0.0
    %1110 = vmatpush1.msra.mxu0 0.0
    %1111 = vmatprep.subr.mxu0 0.0
    %1112 = vmatpush1.msra.mxu0 0.0
    %1113 = vmatprep.mubr.f32.mxu0 0.0
    %1114 = vmatmul.mubr.f32.gmra.mrb[0].mxu0 %v1047
    %v1115 = vpop.f32.mrb[0].mxu0
    %v1116 = vadd.f32 0.0, %v1115
    %v1117 = vpop.f32.mrb[0].mxu0
    %1118 = vdwg.mxu0
    %v1120 = vsel %vm972, %v966, 0
    %1122 = vmatprep.subr.mxu0 0.0
    %1123 = vmatpush1.msra.mxu0 %v39
    %1124 = vmatprep.subr.mxu0 0.0
    %1125 = vmatpush1.msra.mxu0 0.0
    %1126 = vmatprep.subr.mxu0 0.0
    %1127 = vmatpush1.msra.mxu0 0.0
    %1128 = vmatprep.subr.mxu0 0.0
    %1129 = vmatpush1.msra.mxu0 0.0
    %1130 = vmatprep.subr.mxu0 0.0
    %1131 = vmatpush1.msra.mxu0 0.0
    %1132 = vmatprep.subr.mxu0 0.0
    %1133 = vmatpush1.msra.mxu0 0.0
    %1134 = vmatprep.subr.mxu0 0.0
    %1135 = vmatpush1.msra.mxu0 0.0
    %1136 = vmatprep.subr.mxu0 0.0
    %1137 = vmatpush1.msra.mxu0 0.0
    %1138 = vmatprep.subr.mxu0 0.0
    %1139 = vmatpush1.msra.mxu0 0.0
    %1140 = vmatprep.subr.mxu0 0.0
    %1141 = vmatpush1.msra.mxu0 0.0
    %1142 = vmatprep.subr.mxu0 0.0
    %1143 = vmatpush1.msra.mxu0 0.0
    %1144 = vmatprep.subr.mxu0 0.0
    %1145 = vmatpush1.msra.mxu0 0.0
    %1146 = vmatprep.subr.mxu0 0.0
    %1147 = vmatpush1.msra.mxu0 0.0
    %1148 = vmatprep.subr.mxu0 0.0
    %1149 = vmatpush1.msra.mxu0 0.0
    %1150 = vmatprep.subr.mxu0 0.0
    %1151 = vmatpush1.msra.mxu0 0.0
    %1152 = vmatprep.subr.mxu0 0.0
    %1153 = vmatpush1.msra.mxu0 0.0
    %1154 = vmatprep.subr.mxu0 0.0
    %1155 = vmatpush1.msra.mxu0 0.0
    %1156 = vmatprep.subr.mxu0 0.0
    %1157 = vmatpush1.msra.mxu0 0.0
    %1158 = vmatprep.subr.mxu0 0.0
    %1159 = vmatpush1.msra.mxu0 0.0
    %1160 = vmatprep.subr.mxu0 0.0
    %1161 = vmatpush1.msra.mxu0 0.0
    %1162 = vmatprep.subr.mxu0 0.0
    %1163 = vmatpush1.msra.mxu0 0.0
    %1164 = vmatprep.subr.mxu0 0.0
    %1165 = vmatpush1.msra.mxu0 0.0
    %1166 = vmatprep.subr.mxu0 0.0
    %1167 = vmatpush1.msra.mxu0 0.0
    %1168 = vmatprep.subr.mxu0 0.0
    %1169 = vmatpush1.msra.mxu0 0.0
    %1170 = vmatprep.subr.mxu0 0.0
    %1171 = vmatpush1.msra.mxu0 0.0
    %1172 = vmatprep.subr.mxu0 0.0
    %1173 = vmatpush1.msra.mxu0 0.0
    %1174 = vmatprep.subr.mxu0 0.0
    %1175 = vmatpush1.msra.mxu0 0.0
    %1176 = vmatprep.subr.mxu0 0.0
    %1177 = vmatpush1.msra.mxu0 0.0
    %1178 = vmatprep.subr.mxu0 0.0
    %1179 = vmatpush1.msra.mxu0 0.0
    %1180 = vmatprep.subr.mxu0 0.0
    %1181 = vmatpush1.msra.mxu0 0.0
    %1182 = vmatprep.subr.mxu0 0.0
    %1183 = vmatpush1.msra.mxu0 0.0
    %1184 = vmatprep.subr.mxu0 0.0
    %1185 = vmatpush1.msra.mxu0 0.0
    %1186 = vmatprep.mubr.f32.mxu0 0.0
    %1187 = vmatmul.mubr.f32.gmra.mrb[0].mxu0 %v1120
    %v1188 = vpop.f32.mrb[0].mxu0
    %v1189 = vadd.f32 0.0, %v1188
    %v1190 = vpop.f32.mrb[0].mxu0
    %1191 = vdwg.mxu0
    %v1193 = vsel %vm972, %v967, 0
    %1195 = vmatprep.subr.mxu0 0.0
    %1196 = vmatpush1.msra.mxu0 %v40
    %1197 = vmatprep.subr.mxu0 0.0
    %1198 = vmatpush1.msra.mxu0 0.0
    %1199 = vmatprep.subr.mxu0 0.0
    %1200 = vmatpush1.msra.mxu0 0.0
    %1201 = vmatprep.subr.mxu0 0.0
    %1202 = vmatpush1.msra.mxu0 0.0
    %1203 = vmatprep.subr.mxu0 0.0
    %1204 = vmatpush1.msra.mxu0 0.0
    %1205 = vmatprep.subr.mxu0 0.0
    %1206 = vmatpush1.msra.mxu0 0.0
    %1207 = vmatprep.subr.mxu0 0.0
    %1208 = vmatpush1.msra.mxu0 0.0
    %1209 = vmatprep.subr.mxu0 0.0
    %1210 = vmatpush1.msra.mxu0 0.0
    %1211 = vmatprep.subr.mxu0 0.0
    %1212 = vmatpush1.msra.mxu0 0.0
    %1213 = vmatprep.subr.mxu0 0.0
    %1214 = vmatpush1.msra.mxu0 0.0
    %1215 = vmatprep.subr.mxu0 0.0
    %1216 = vmatpush1.msra.mxu0 0.0
    %1217 = vmatprep.subr.mxu0 0.0
    %1218 = vmatpush1.msra.mxu0 0.0
    %1219 = vmatprep.subr.mxu0 0.0
    %1220 = vmatpush1.msra.mxu0 0.0
    %1221 = vmatprep.subr.mxu0 0.0
    %1222 = vmatpush1.msra.mxu0 0.0
    %1223 = vmatprep.subr.mxu0 0.0
    %1224 = vmatpush1.msra.mxu0 0.0
    %1225 = vmatprep.subr.mxu0 0.0
    %1226 = vmatpush1.msra.mxu0 0.0
    %1227 = vmatprep.subr.mxu0 0.0
    %1228 = vmatpush1.msra.mxu0 0.0
    %1229 = vmatprep.subr.mxu0 0.0
    %1230 = vmatpush1.msra.mxu0 0.0
    %1231 = vmatprep.subr.mxu0 0.0
    %1232 = vmatpush1.msra.mxu0 0.0
    %1233 = vmatprep.subr.mxu0 0.0
    %1234 = vmatpush1.msra.mxu0 0.0
    %1235 = vmatprep.subr.mxu0 0.0
    %1236 = vmatpush1.msra.mxu0 0.0
    %1237 = vmatprep.subr.mxu0 0.0
    %1238 = vmatpush1.msra.mxu0 0.0
    %1239 = vmatprep.subr.mxu0 0.0
    %1240 = vmatpush1.msra.mxu0 0.0
    %1241 = vmatprep.subr.mxu0 0.0
    %1242 = vmatpush1.msra.mxu0 0.0
    %1243 = vmatprep.subr.mxu0 0.0
    %1244 = vmatpush1.msra.mxu0 0.0
    %1245 = vmatprep.subr.mxu0 0.0
    %1246 = vmatpush1.msra.mxu0 0.0
    %1247 = vmatprep.subr.mxu0 0.0
    %1248 = vmatpush1.msra.mxu0 0.0
    %1249 = vmatprep.subr.mxu0 0.0
    %1250 = vmatpush1.msra.mxu0 0.0
    %1251 = vmatprep.subr.mxu0 0.0
    %1252 = vmatpush1.msra.mxu0 0.0
    %1253 = vmatprep.subr.mxu0 0.0
    %1254 = vmatpush1.msra.mxu0 0.0
    %1255 = vmatprep.subr.mxu0 0.0
    %1256 = vmatpush1.msra.mxu0 0.0
    %1257 = vmatprep.subr.mxu0 0.0
    %1258 = vmatpush1.msra.mxu0 0.0
    %1259 = vmatprep.mubr.f32.mxu0 0.0
    %1260 = vmatmul.mubr.f32.gmra.mrb[0].mxu0 %v1193
    %v1261 = vpop.f32.mrb[0].mxu0
    %v1262 = vadd.f32 0.0, %v1261
    %v1263 = vpop.f32.mrb[0].mxu0
    %1264 = vdwg.mxu0
    %v1266 = vsel %vm972, %v968, 0
    %1268 = vmatprep.subr.mxu0 0.0
    %1269 = vmatpush1.msra.mxu0 %v41
    %1270 = vmatprep.subr.mxu0 0.0
    %1271 = vmatpush1.msra.mxu0 0.0
    %1272 = vmatprep.subr.mxu0 0.0
    %1273 = vmatpush1.msra.mxu0 0.0
    %1274 = vmatprep.subr.mxu0 0.0
    %1275 = vmatpush1.msra.mxu0 0.0
    %1276 = vmatprep.subr.mxu0 0.0
    %1277 = vmatpush1.msra.mxu0 0.0
    %1278 = vmatprep.subr.mxu0 0.0
    %1279 = vmatpush1.msra.mxu0 0.0
    %1280 = vmatprep.subr.mxu0 0.0
    %1281 = vmatpush1.msra.mxu0 0.0
    %1282 = vmatprep.subr.mxu0 0.0
    %1283 = vmatpush1.msra.mxu0 0.0
    %1284 = vmatprep.subr.mxu0 0.0
    %1285 = vmatpush1.msra.mxu0 0.0
    %1286 = vmatprep.subr.mxu0 0.0
    %1287 = vmatpush1.msra.mxu0 0.0
    %1288 = vmatprep.subr.mxu0 0.0
    %1289 = vmatpush1.msra.mxu0 0.0
    %1290 = vmatprep.subr.mxu0 0.0
    %1291 = vmatpush1.msra.mxu0 0.0
    %1292 = vmatprep.subr.mxu0 0.0
    %1293 = vmatpush1.msra.mxu0 0.0
    %1294 = vmatprep.subr.mxu0 0.0
    %1295 = vmatpush1.msra.mxu0 0.0
    %1296 = vmatprep.subr.mxu0 0.0
    %1297 = vmatpush1.msra.mxu0 0.0
    %1298 = vmatprep.subr.mxu0 0.0
    %1299 = vmatpush1.msra.mxu0 0.0
    %1300 = vmatprep.subr.mxu0 0.0
    %1301 = vmatpush1.msra.mxu0 0.0
    %1302 = vmatprep.subr.mxu0 0.0
    %1303 = vmatpush1.msra.mxu0 0.0
    %1304 = vmatprep.subr.mxu0 0.0
    %1305 = vmatpush1.msra.mxu0 0.0
    %1306 = vmatprep.subr.mxu0 0.0
    %1307 = vmatpush1.msra.mxu0 0.0
    %1308 = vmatprep.subr.mxu0 0.0
    %1309 = vmatpush1.msra.mxu0 0.0
    %1310 = vmatprep.subr.mxu0 0.0
    %1311 = vmatpush1.msra.mxu0 0.0
    %1312 = vmatprep.subr.mxu0 0.0
    %1313 = vmatpush1.msra.mxu0 0.0
    %1314 = vmatprep.subr.mxu0 0.0
    %1315 = vmatpush1.msra.mxu0 0.0
    %1316 = vmatprep.subr.mxu0 0.0
    %1317 = vmatpush1.msra.mxu0 0.0
    %1318 = vmatprep.subr.mxu0 0.0
    %1319 = vmatpush1.msra.mxu0 0.0
    %1320 = vmatprep.subr.mxu0 0.0
    %1321 = vmatpush1.msra.mxu0 0.0
    %1322 = vmatprep.subr.mxu0 0.0
    %1323 = vmatpush1.msra.mxu0 0.0
    %1324 = vmatprep.subr.mxu0 0.0
    %1325 = vmatpush1.msra.mxu0 0.0
    %1326 = vmatprep.subr.mxu0 0.0
    %1327 = vmatpush1.msra.mxu0 0.0
    %1328 = vmatprep.subr.mxu0 0.0
    %1329 = vmatpush1.msra.mxu0 0.0
    %1330 = vmatprep.subr.mxu0 0.0
    %1331 = vmatpush1.msra.mxu0 0.0
    %1332 = vmatprep.mubr.f32.mxu0 0.0
    %1333 = vmatmul.mubr.f32.gmra.mrb[0].mxu0 %v1266
    %v1334 = vpop.f32.mrb[0].mxu0
    %v1335 = vadd.f32 0.0, %v1334
    %v1336 = vpop.f32.mrb[0].mxu0
    %1337 = vdwg.mxu0
    %v1339 = vsel %vm972, %v969, 0
    %1341 = vmatprep.subr.mxu0 0.0
    %1342 = vmatpush1.msra.mxu0 %v42
    %1343 = vmatprep.subr.mxu0 0.0
    %1344 = vmatpush1.msra.mxu0 0.0
    %1345 = vmatprep.subr.mxu0 0.0
    %1346 = vmatpush1.msra.mxu0 0.0
    %1347 = vmatprep.subr.mxu0 0.0
    %1348 = vmatpush1.msra.mxu0 0.0
    %1349 = vmatprep.subr.mxu0 0.0
    %1350 = vmatpush1.msra.mxu0 0.0
    %1351 = vmatprep.subr.mxu0 0.0
    %1352 = vmatpush1.msra.mxu0 0.0
    %1353 = vmatprep.subr.mxu0 0.0
    %1354 = vmatpush1.msra.mxu0 0.0
    %1355 = vmatprep.subr.mxu0 0.0
    %1356 = vmatpush1.msra.mxu0 0.0
    %1357 = vmatprep.subr.mxu0 0.0
    %1358 = vmatpush1.msra.mxu0 0.0
    %1359 = vmatprep.subr.mxu0 0.0
    %1360 = vmatpush1.msra.mxu0 0.0
    %1361 = vmatprep.subr.mxu0 0.0
    %1362 = vmatpush1.msra.mxu0 0.0
    %1363 = vmatprep.subr.mxu0 0.0
    %1364 = vmatpush1.msra.mxu0 0.0
    %1365 = vmatprep.subr.mxu0 0.0
    %1366 = vmatpush1.msra.mxu0 0.0
    %1367 = vmatprep.subr.mxu0 0.0
    %1368 = vmatpush1.msra.mxu0 0.0
    %1369 = vmatprep.subr.mxu0 0.0
    %1370 = vmatpush1.msra.mxu0 0.0
    %1371 = vmatprep.subr.mxu0 0.0
    %1372 = vmatpush1.msra.mxu0 0.0
    %1373 = vmatprep.subr.mxu0 0.0
    %1374 = vmatpush1.msra.mxu0 0.0
    %1375 = vmatprep.subr.mxu0 0.0
    %1376 = vmatpush1.msra.mxu0 0.0
    %1377 = vmatprep.subr.mxu0 0.0
    %1378 = vmatpush1.msra.mxu0 0.0
    %1379 = vmatprep.subr.mxu0 0.0
    %1380 = vmatpush1.msra.mxu0 0.0
    %1381 = vmatprep.subr.mxu0 0.0
    %1382 = vmatpush1.msra.mxu0 0.0
    %1383 = vmatprep.subr.mxu0 0.0
    %1384 = vmatpush1.msra.mxu0 0.0
    %1385 = vmatprep.subr.mxu0 0.0
    %1386 = vmatpush1.msra.mxu0 0.0
    %1387 = vmatprep.subr.mxu0 0.0
    %1388 = vmatpush1.msra.mxu0 0.0
    %1389 = vmatprep.subr.mxu0 0.0
    %1390 = vmatpush1.msra.mxu0 0.0
    %1391 = vmatprep.subr.mxu0 0.0
    %1392 = vmatpush1.msra.mxu0 0.0
    %1393 = vmatprep.subr.mxu0 0.0
    %1394 = vmatpush1.msra.mxu0 0.0
    %1395 = vmatprep.subr.mxu0 0.0
    %1396 = vmatpush1.msra.mxu0 0.0
    %1397 = vmatprep.subr.mxu0 0.0
    %1398 = vmatpush1.msra.mxu0 0.0
    %1399 = vmatprep.subr.mxu0 0.0
    %1400 = vmatpush1.msra.mxu0 0.0
    %1401 = vmatprep.subr.mxu0 0.0
    %1402 = vmatpush1.msra.mxu0 0.0
    %1403 = vmatprep.subr.mxu0 0.0
    %1404 = vmatpush1.msra.mxu0 0.0
    %1405 = vmatprep.mubr.f32.mxu0 0.0
    %1406 = vmatmul.mubr.f32.gmra.mrb[0].mxu0 %v1339
    %v1407 = vpop.f32.mrb[0].mxu0
    %v1408 = vadd.f32 0.0, %v1407
    %v1409 = vpop.f32.mrb[0].mxu0
    %1410 = vdwg.mxu0
    %v1412 = vsel %vm972, %v970, 0
    %1414 = vmatprep.subr.mxu0 0.0
    %1415 = vmatpush1.msra.mxu0 %v43
    %1416 = vmatprep.subr.mxu0 0.0
    %1417 = vmatpush1.msra.mxu0 0.0
    %1418 = vmatprep.subr.mxu0 0.0
    %1419 = vmatpush1.msra.mxu0 0.0
    %1420 = vmatprep.subr.mxu0 0.0
    %1421 = vmatpush1.msra.mxu0 0.0
    %1422 = vmatprep.subr.mxu0 0.0
    %1423 = vmatpush1.msra.mxu0 0.0
    %1424 = vmatprep.subr.mxu0 0.0
    %1425 = vmatpush1.msra.mxu0 0.0
    %1426 = vmatprep.subr.mxu0 0.0
    %1427 = vmatpush1.msra.mxu0 0.0
    %1428 = vmatprep.subr.mxu0 0.0
    %1429 = vmatpush1.msra.mxu0 0.0
    %1430 = vmatprep.subr.mxu0 0.0
    %1431 = vmatpush1.msra.mxu0 0.0
    %1432 = vmatprep.subr.mxu0 0.0
    %1433 = vmatpush1.msra.mxu0 0.0
    %1434 = vmatprep.subr.mxu0 0.0
    %1435 = vmatpush1.msra.mxu0 0.0
    %1436 = vmatprep.subr.mxu0 0.0
    %1437 = vmatpush1.msra.mxu0 0.0
    %1438 = vmatprep.subr.mxu0 0.0
    %1439 = vmatpush1.msra.mxu0 0.0
    %1440 = vmatprep.subr.mxu0 0.0
    %1441 = vmatpush1.msra.mxu0 0.0
    %1442 = vmatprep.subr.mxu0 0.0
    %1443 = vmatpush1.msra.mxu0 0.0
    %1444 = vmatprep.subr.mxu0 0.0
    %1445 = vmatpush1.msra.mxu0 0.0
    %1446 = vmatprep.subr.mxu0 0.0
    %1447 = vmatpush1.msra.mxu0 0.0
    %1448 = vmatprep.subr.mxu0 0.0
    %1449 = vmatpush1.msra.mxu0 0.0
    %1450 = vmatprep.subr.mxu0 0.0
    %1451 = vmatpush1.msra.mxu0 0.0
    %1452 = vmatprep.subr.mxu0 0.0
    %1453 = vmatpush1.msra.mxu0 0.0
    %1454 = vmatprep.subr.mxu0 0.0
    %1455 = vmatpush1.msra.mxu0 0.0
    %1456 = vmatprep.subr.mxu0 0.0
    %1457 = vmatpush1.msra.mxu0 0.0
    %1458 = vmatprep.subr.mxu0 0.0
    %1459 = vmatpush1.msra.mxu0 0.0
    %1460 = vmatprep.subr.mxu0 0.0
    %1461 = vmatpush1.msra.mxu0 0.0
    %1462 = vmatprep.subr.mxu0 0.0
    %1463 = vmatpush1.msra.mxu0 0.0
    %1464 = vmatprep.subr.mxu0 0.0
    %1465 = vmatpush1.msra.mxu0 0.0
    %1466 = vmatprep.subr.mxu0 0.0
    %1467 = vmatpush1.msra.mxu0 0.0
    %1468 = vmatprep.subr.mxu0 0.0
    %1469 = vmatpush1.msra.mxu0 0.0
    %1470 = vmatprep.subr.mxu0 0.0
    %1471 = vmatpush1.msra.mxu0 0.0
    %1472 = vmatprep.subr.mxu0 0.0
    %1473 = vmatpush1.msra.mxu0 0.0
    %1474 = vmatprep.subr.mxu0 0.0
    %1475 = vmatpush1.msra.mxu0 0.0
    %1476 = vmatprep.subr.mxu0 0.0
    %1477 = vmatpush1.msra.mxu0 0.0
    %1478 = vmatprep.mubr.f32.mxu0 0.0
    %1479 = vmatmul.mubr.f32.gmra.mrb[0].mxu0 %v1412
    %v1480 = vpop.f32.mrb[0].mxu0
    %v1481 = vadd.f32 0.0, %v1480
    %v1482 = vpop.f32.mrb[0].mxu0
    %1483 = vdwg.mxu0
    %v1485 = vsel %vm972, %v971, 0
    %1487 = vmatprep.subr.mxu0 0.0
    %1488 = vmatpush1.msra.mxu0 %v44
    %1489 = vmatprep.subr.mxu0 0.0
    %1490 = vmatpush1.msra.mxu0 0.0
    %1491 = vmatprep.subr.mxu0 0.0
    %1492 = vmatpush1.msra.mxu0 0.0
    %1493 = vmatprep.subr.mxu0 0.0
    %1494 = vmatpush1.msra.mxu0 0.0
    %1495 = vmatprep.subr.mxu0 0.0
    %1496 = vmatpush1.msra.mxu0 0.0
    %1497 = vmatprep.subr.mxu0 0.0
    %1498 = vmatpush1.msra.mxu0 0.0
    %1499 = vmatprep.subr.mxu0 0.0
    %1500 = vmatpush1.msra.mxu0 0.0
    %1501 = vmatprep.subr.mxu0 0.0
    %1502 = vmatpush1.msra.mxu0 0.0
    %1503 = vmatprep.subr.mxu0 0.0
    %1504 = vmatpush1.msra.mxu0 0.0
    %1505 = vmatprep.subr.mxu0 0.0
    %1506 = vmatpush1.msra.mxu0 0.0
    %1507 = vmatprep.subr.mxu0 0.0
    %1508 = vmatpush1.msra.mxu0 0.0
    %1509 = vmatprep.subr.mxu0 0.0
    %1510 = vmatpush1.msra.mxu0 0.0
    %1511 = vmatprep.subr.mxu0 0.0
    %1512 = vmatpush1.msra.mxu0 0.0
    %1513 = vmatprep.subr.mxu0 0.0
    %1514 = vmatpush1.msra.mxu0 0.0
    %1515 = vmatprep.subr.mxu0 0.0
    %1516 = vmatpush1.msra.mxu0 0.0
    %1517 = vmatprep.subr.mxu0 0.0
    %1518 = vmatpush1.msra.mxu0 0.0
    %1519 = vmatprep.subr.mxu0 0.0
    %1520 = vmatpush1.msra.mxu0 0.0
    %1521 = vmatprep.subr.mxu0 0.0
    %1522 = vmatpush1.msra.mxu0 0.0
    %1523 = vmatprep.subr.mxu0 0.0
    %1524 = vmatpush1.msra.mxu0 0.0
    %1525 = vmatprep.subr.mxu0 0.0
    %1526 = vmatpush1.msra.mxu0 0.0
    %1527 = vmatprep.subr.mxu0 0.0
    %1528 = vmatpush1.msra.mxu0 0.0
    %1529 = vmatprep.subr.mxu0 0.0
    %1530 = vmatpush1.msra.mxu0 0.0
    %1531 = vmatprep.subr.mxu0 0.0
    %1532 = vmatpush1.msra.mxu0 0.0
    %1533 = vmatprep.subr.mxu0 0.0
    %1534 = vmatpush1.msra.mxu0 0.0
    %1535 = vmatprep.subr.mxu0 0.0
    %1536 = vmatpush1.msra.mxu0 0.0
    %1537 = vmatprep.subr.mxu0 0.0
    %1538 = vmatpush1.msra.mxu0 0.0
    %1539 = vmatprep.subr.mxu0 0.0
    %1540 = vmatpush1.msra.mxu0 0.0
    %1541 = vmatprep.subr.mxu0 0.0
    %1542 = vmatpush1.msra.mxu0 0.0
    %1543 = vmatprep.subr.mxu0 0.0
    %1544 = vmatpush1.msra.mxu0 0.0
    %1545 = vmatprep.subr.mxu0 0.0
    %1546 = vmatpush1.msra.mxu0 0.0
    %1547 = vmatprep.subr.mxu0 0.0
    %1548 = vmatpush1.msra.mxu0 0.0
    %1549 = vmatprep.subr.mxu0 0.0
    %1550 = vmatpush1.msra.mxu0 0.0
    %1551 = vmatprep.mubr.f32.mxu0 0.0
    %1552 = vmatmul.mubr.f32.gmra.mrb[0].mxu0 %v1485
    %v1553 = vpop.f32.mrb[0].mxu0
    %v1554 = vadd.f32 0.0, %v1553
    %v1555 = vpop.f32.mrb[0].mxu0
    %1556 = vdwg.mxu0
    %1557 = vrot.lane.b32.xlu0 %v184, 32
    %v1558 = vpop.permute.xlu0 %1557
    %v1559 = vsel %vm77, %v1558, 0
    %1561 = vmatprep.subr.mxu0 0.0
    %1562 = vmatpush1.msra.mxu0 %v57
    %1563 = vmatprep.subr.mxu0 0.0
    %1564 = vmatpush1.msra.mxu0 %v58
    %1565 = vmatprep.subr.mxu0 0.0
    %1566 = vmatpush1.msra.mxu0 %v59
    %1567 = vmatprep.subr.mxu0 0.0
    %1568 = vmatpush1.msra.mxu0 %v60
    %1569 = vmatprep.subr.mxu0 0.0
    %1570 = vmatpush1.msra.mxu0 0.0
    %1571 = vmatprep.subr.mxu0 0.0
    %1572 = vmatpush1.msra.mxu0 0.0
    %1573 = vmatprep.subr.mxu0 0.0
    %1574 = vmatpush1.msra.mxu0 0.0
    %1575 = vmatprep.subr.mxu0 0.0
    %1576 = vmatpush1.msra.mxu0 0.0
    %1577 = vmatprep.subr.mxu0 0.0
    %1578 = vmatpush1.msra.mxu0 0.0
    %1579 = vmatprep.subr.mxu0 0.0
    %1580 = vmatpush1.msra.mxu0 0.0
    %1581 = vmatprep.subr.mxu0 0.0
    %1582 = vmatpush1.msra.mxu0 0.0
    %1583 = vmatprep.subr.mxu0 0.0
    %1584 = vmatpush1.msra.mxu0 0.0
    %1585 = vmatprep.subr.mxu0 0.0
    %1586 = vmatpush1.msra.mxu0 0.0
    %1587 = vmatprep.subr.mxu0 0.0
    %1588 = vmatpush1.msra.mxu0 0.0
    %1589 = vmatprep.subr.mxu0 0.0
    %1590 = vmatpush1.msra.mxu0 0.0
    %1591 = vmatprep.subr.mxu0 0.0
    %1592 = vmatpush1.msra.mxu0 0.0
    %1593 = vmatprep.subr.mxu0 0.0
    %1594 = vmatpush1.msra.mxu0 0.0
    %1595 = vmatprep.subr.mxu0 0.0
    %1596 = vmatpush1.msra.mxu0 0.0
    %1597 = vmatprep.subr.mxu0 0.0
    %1598 = vmatpush1.msra.mxu0 0.0
    %1599 = vmatprep.subr.mxu0 0.0
    %1600 = vmatpush1.msra.mxu0 0.0
    %1601 = vmatprep.subr.mxu0 0.0
    %1602 = vmatpush1.msra.mxu0 0.0
    %1603 = vmatprep.subr.mxu0 0.0
    %1604 = vmatpush1.msra.mxu0 0.0
    %1605 = vmatprep.subr.mxu0 0.0
    %1606 = vmatpush1.msra.mxu0 0.0
    %1607 = vmatprep.subr.mxu0 0.0
    %1608 = vmatpush1.msra.mxu0 0.0
    %1609 = vmatprep.subr.mxu0 0.0
    %1610 = vmatpush1.msra.mxu0 0.0
    %1611 = vmatprep.subr.mxu0 0.0
    %1612 = vmatpush1.msra.mxu0 0.0
    %1613 = vmatprep.subr.mxu0 0.0
    %1614 = vmatpush1.msra.mxu0 0.0
    %1615 = vmatprep.subr.mxu0 0.0
    %1616 = vmatpush1.msra.mxu0 0.0
    %1617 = vmatprep.subr.mxu0 0.0
    %1618 = vmatpush1.msra.mxu0 0.0
    %1619 = vmatprep.subr.mxu0 0.0
    %1620 = vmatpush1.msra.mxu0 0.0
    %1621 = vmatprep.subr.mxu0 0.0
    %1622 = vmatpush1.msra.mxu0 0.0
    %1623 = vmatprep.subr.mxu0 0.0
    %1624 = vmatpush1.msra.mxu0 0.0
    %1625 = vmatprep.mubr.f32.mxu0 0.0
    %1626 = vmatmul.mubr.f32.gmra.mrb[0].mxu0 %v1559
    %v1627 = vpop.f32.mrb[0].mxu0
    %v1628 = vadd.f32 0.0, %v1627
    %v1629 = vpop.f32.mrb[0].mxu0
    %1630 = vdwg.mxu0
    %v1639 = vrot.slane %v1116, 7
    %vm1640 = vcmask 1041409
    %v1641 = vsel %vm1640, %v1639, %v1043
    %v1642 = vrot.slane %v1189, 6
    %vm1643 = vcmask 1042434
    %v1644 = vsel %vm1643, %v1642, %v1641
    %v1645 = vrot.slane %v1262, 5
    %vm1646 = vcmask 1043459
    %v1647 = vsel %vm1646, %v1645, %v1644
    %v1648 = vrot.slane %v1335, 4
    %vm1649 = vcmask 1044484
    %v1650 = vsel %vm1649, %v1648, %v1647
    %v1651 = vrot.slane %v1408, 3
    %vm1652 = vcmask 1045509
    %v1653 = vsel %vm1652, %v1651, %v1650
    %v1654 = vrot.slane %v1481, 2
    %vm1655 = vcmask 1046534
    %v1656 = vsel %vm1655, %v1654, %v1653
    %v1657 = vrot.slane %v1554, 1
    %vm1658 = vcmask 1047559
    %v1659 = vsel %vm1658, %v1657, %v1656
    %v1660 = vsel %vm77, %v1659, 0
    %1662 = vmatprep.subr.mxu0 0.0
    %1663 = vmatpush1.msra.mxu0 %v53
    %1664 = vmatprep.subr.mxu0 0.0
    %1665 = vmatpush1.msra.mxu0 %v54
    %1666 = vmatprep.subr.mxu0 0.0
    %1667 = vmatpush1.msra.mxu0 %v55
    %1668 = vmatprep.subr.mxu0 0.0
    %1669 = vmatpush1.msra.mxu0 %v56
    %1670 = vmatprep.subr.mxu0 0.0
    %1671 = vmatpush1.msra.mxu0 0.0
    %1672 = vmatprep.subr.mxu0 0.0
    %1673 = vmatpush1.msra.mxu0 0.0
    %1674 = vmatprep.subr.mxu0 0.0
    %1675 = vmatpush1.msra.mxu0 0.0
    %1676 = vmatprep.subr.mxu0 0.0
    %1677 = vmatpush1.msra.mxu0 0.0
    %1678 = vmatprep.subr.mxu0 0.0
    %1679 = vmatpush1.msra.mxu0 0.0
    %1680 = vmatprep.subr.mxu0 0.0
    %1681 = vmatpush1.msra.mxu0 0.0
    %1682 = vmatprep.subr.mxu0 0.0
    %1683 = vmatpush1.msra.mxu0 0.0
    %1684 = vmatprep.subr.mxu0 0.0
    %1685 = vmatpush1.msra.mxu0 0.0
    %1686 = vmatprep.subr.mxu0 0.0
    %1687 = vmatpush1.msra.mxu0 0.0
    %1688 = vmatprep.subr.mxu0 0.0
    %1689 = vmatpush1.msra.mxu0 0.0
    %1690 = vmatprep.subr.mxu0 0.0
    %1691 = vmatpush1.msra.mxu0 0.0
    %1692 = vmatprep.subr.mxu0 0.0
    %1693 = vmatpush1.msra.mxu0 0.0
    %1694 = vmatprep.subr.mxu0 0.0
    %1695 = vmatpush1.msra.mxu0 0.0
    %1696 = vmatprep.subr.mxu0 0.0
    %1697 = vmatpush1.msra.mxu0 0.0
    %1698 = vmatprep.subr.mxu0 0.0
    %1699 = vmatpush1.msra.mxu0 0.0
    %1700 = vmatprep.subr.mxu0 0.0
    %1701 = vmatpush1.msra.mxu0 0.0
    %1702 = vmatprep.subr.mxu0 0.0
    %1703 = vmatpush1.msra.mxu0 0.0
    %1704 = vmatprep.subr.mxu0 0.0
    %1705 = vmatpush1.msra.mxu0 0.0
    %1706 = vmatprep.subr.mxu0 0.0
    %1707 = vmatpush1.msra.mxu0 0.0
    %1708 = vmatprep.subr.mxu0 0.0
    %1709 = vmatpush1.msra.mxu0 0.0
    %1710 = vmatprep.subr.mxu0 0.0
    %1711 = vmatpush1.msra.mxu0 0.0
    %1712 = vmatprep.subr.mxu0 0.0
    %1713 = vmatpush1.msra.mxu0 0.0
    %1714 = vmatprep.subr.mxu0 0.0
    %1715 = vmatpush1.msra.mxu0 0.0
    %1716 = vmatprep.subr.mxu0 0.0
    %1717 = vmatpush1.msra.mxu0 0.0
    %1718 = vmatprep.subr.mxu0 0.0
    %1719 = vmatpush1.msra.mxu0 0.0
    %1720 = vmatprep.subr.mxu0 0.0
    %1721 = vmatpush1.msra.mxu0 0.0
    %1722 = vmatprep.subr.mxu0 0.0
    %1723 = vmatpush1.msra.mxu0 0.0
    %1724 = vmatprep.subr.mxu0 0.0
    %1725 = vmatpush1.msra.mxu0 0.0
    %1726 = vmatprep.mubr.f32.mxu0 0.0
    %1727 = vmatmul.mubr.f32.gmra.mrb[0].mxu0 %v1660
    %v1728 = vpop.f32.mrb[0].mxu0
    %v1729 = vadd.f32 %v1628, %v1728
    %v1730 = vpop.f32.mrb[0].mxu0
    %1731 = vdwg.mxu0
    %v1733 = vlaneseq
    %v1734 = vshrl.u32 %v1733, 7
    %v1735 = vsub.s32 0, %v1734
    %v1736 = vrot.slane %v61, %v1735
    %v1738 = vadd.f32 %v1729, %v1736
    %v1739 = vtanh.pop %v1738
    %s1740 = scalar_lea.vmem %s8, %s79
    %1741 = vst.msk [vmem:[%s1740] sm:$0xff] %vm77, %v1739
    %1744 = vrot.lane.b32.xlu0 %v178, 96
    %v1745 = vpop.permute.xlu0 %1744
  $region38: #{seq2seq_forward.3} parent=0 // loop_footer
    %s69 = sadd.s32 1, %s65
  $region39: #{seq2seq_forward.3} parent=0 // loop_footer_branch
    %64 = sbr.rel target = $region35
  $region40: #{seq2seq_forward.3} parent=0 // loop_exit
    _
  // Predicated region
  $region41: #{seq2seq_forward.3} parent=0 // pred_check
    _
  $region42: #{seq2seq_forward.3} parent=0 // pred_check_branch
    %1748 = sbr.rel (0) target = $region44
  $region43: #{seq2seq_forward.3} parent=0 // pred_region
    _
  $region44: #{seq2seq_forward.3} parent=0 // pred_fallthru
    _
  // Predicated region
  $region45: #{seq2seq_forward.3} parent=0 // pred_check
    _
  $region46: #{seq2seq_forward.3} parent=0 // pred_check_branch
    %1750 = sbr.rel (0) target = $region48
  $region47: #{seq2seq_forward.3} parent=0 // pred_region
    _
  $region48: #{seq2seq_forward.3} parent=0 // pred_fallthru
    _

</llo_original>
